<compile_context>
chip_gen: v7x
topology: tpu7x:2x2x1
jax: 0.10.0
libtpu: 0.0.40
codegen_flags: <defaults>
</compile_context>

<pallas_src>
import functools
import math

import jax
import jax.numpy as jnp
from jax import lax
from jax.experimental import pallas as pl
from jax.experimental.pallas import tpu as pltpu

_MAX_TILE_NC = 8  # bound for the static per-image unroll inside one block


def _gaussian_kernel_1d(kernel_size: int, sigma: float):
    # Matches kornia.filters.get_gaussian_kernel1d (normalized to sum 1).
    xs = [float(i - kernel_size // 2) for i in range(kernel_size)]
    if kernel_size % 2 == 0:
        xs = [x + 0.5 for x in xs]
    g = [math.exp(-(x * x) / (2.0 * sigma * sigma)) for x in xs]
    s = sum(g)
    return [v / s for v in g]


def _vmem_budgets():
    """(vmem_limit_bytes, block_budget_bytes), derived from the chip generation."""
    cap = 128 * 1024 * 1024
    try:
        info = pltpu.get_tpu_info()
        cap = int(getattr(info, "vmem_capacity_bytes", cap)) or cap
    except Exception:
        pass
    if cap <= 64 * 1024 * 1024:            # v7x-class: 64 MiB per TensorCore
        return 36 * 1024 * 1024, 12 * 1024 * 1024
    return 96 * 1024 * 1024, 48 * 1024 * 1024   # v5e / v6e: 128 MiB


def _pick_tile_nc(nc: int, h: int, w: int, block_budget: int) -> int:
    """Images per block: big enough to amortize grid-step overhead / DMA size,
    small enough for VMEM and for >= 2 grid steps (v7x megacore)."""
    hr = -(-h // 8) * 8                    # sublane-padded rows
    wr = -(-w // 128) * 128                # lane-padded cols
    per_image = hr * wr * 4                # f32 bytes per image-sized array
    # 2x double-buffered in+out blocks (4 * tile) + ~8 per-image f32 temporaries
    # for the image currently being processed.
    max_tile = max(1, (block_budget - 8 * per_image) // (4 * per_image))
    tile = min(nc, max_tile, _MAX_TILE_NC)
    if nc >= 2:
        tile = min(tile, (nc + 1) // 2)    # guarantee >= 2 grid steps
    return max(1, int(tile))


def _reflect_index(i: int, n: int) -> int:
    if i < 0:
        return -i
    if i >= n:
        return 2 * (n - 1) - i
    return i


def _exact_edge_value(x2d, axis: int, j: int, weights, pad_front: int, n: int):
    """Exact reflect-blurred value at boundary position j along `axis`.
    Returns shape (H, 1) for axis=1 or (1, W) for axis=0."""
    coeffs = {}
    for k, wk in enumerate(weights):
        c = _reflect_index(j + k - pad_front, n)
        coeffs[c] = coeffs.get(c, 0.0) + wk
    val = None
    for c in sorted(coeffs):
        sl = x2d[:, c:c + 1] if axis == 1 else x2d[c:c + 1, :]
        term = coeffs[c] * sl
        val = term if val is None else val + term
    return val


def _blur_1d(x2d, axis: int, weights, pad_front: int, pad_rear: int, use_roll: bool):
    """1-D reflect-padded gaussian blur of a 2-D (H, W) tile along `axis`."""
    size = len(weights)
    n = x2d.shape[axis]
    if size == 1:
        return weights[0] * x2d

    def paired_sum(tap):
        # Gaussian weights are symmetric: pair tap k with tap size-1-k.
        acc = None
        lo, hi = 0, size - 1
        while lo <= hi:
            term = tap(lo) if lo == hi else tap(lo) + tap(hi)
            term = weights[lo] * term
            acc = term if acc is None else acc + term
            lo += 1
            hi -= 1
        return acc

    if use_roll:
        # Wrap-around taps on the XLU (keeps everything vreg-aligned); the
        # pad_front/pad_rear boundary positions are fixed up exactly below.
        def tap(k):
            d = k - pad_front
            if d == 0:
                return x2d
            return pltpu.roll(x2d, shift=(-d) % n, axis=axis)

        acc = paired_sum(tap)
        pos = lax.broadcasted_iota(
            jnp.int32, (1, n) if axis == 1 else (n, 1), axis)
        for j in list(range(pad_front)) + list(range(n - pad_rear, n)):
            acc = jnp.where(
                pos == j,
                _exact_edge_value(x2d, axis, j, weights, pad_front, n),
                acc)
        return acc

    # Legacy path (dim not natively tiled): reflect-concat + shifted slices.
    if pad_front or pad_rear:
        if axis == 1:
            front = [x2d[:, p:p + 1] for p in range(pad_front, 0, -1)]
            rear = [x2d[:, n - 2 - p:n - 1 - p] for p in range(pad_rear)]
        else:
            front = [x2d[p:p + 1, :] for p in range(pad_front, 0, -1)]
            rear = [x2d[n - 2 - p:n - 1 - p, :] for p in range(pad_rear)]
        xp = jnp.concatenate(front + [x2d] + rear, axis=axis)
    else:
        xp = x2d

    def tap(k):
        return xp[:, k:k + n] if axis == 1 else xp[k:k + n, :]

    return paired_sum(tap)


def _unsharp_kernel(x_ref, out_ref, *, weights, pad_front, pad_rear, roll_w, roll_h):
    """Block: (TILE_NC, H, W).  Each image is processed as a 2-D (H, W) tile."""
    tile = x_ref.shape[0]
    for t in range(tile):                     # tile <= _MAX_TILE_NC: static unroll
        xi = x_ref[t].astype(jnp.float32)                              # (H, W)
        hb = _blur_1d(xi, 1, weights, pad_front, pad_rear, roll_w)     # lane axis
        vb = _blur_1d(hb, 0, weights, pad_front, pad_rear, roll_h)     # sublane axis
        out_ref[t] = (xi - vb).astype(out_ref.dtype)


def unsharp_mask(a: jax.Array, sigma: float) -> jax.Array:
    """Forward pass of UnsharpMask.  a: (N, C, H, W); returns same layout
    (spatial dims may grow if H or W < size+1, matching the PyTorch module)."""
    assert a.ndim == 4
    size = int(4 * sigma) + 1
    target = size + 1

    N, C, H, W = a.shape
    # ensure_size: zero-pad bottom/right up to (size+1) spatial extent.
    pad_h = max(0, target - H)
    pad_w = max(0, target - W)
    if pad_h or pad_w:
        a = jnp.pad(a, ((0, 0), (0, 0), (0, pad_h), (0, pad_w)))
    N, C, H, W = a.shape

    weights = _gaussian_kernel_1d(size, sigma)
    # Matches kornia _compute_padding: front = (size-1)//2, rear = the rest.
    pad_front = (size - 1) // 2
    pad_rear = (size - 1) - pad_front

    NC = N * C
    x = a.reshape(NC, H, W)

    vmem_limit, block_budget = _vmem_budgets()
    tile_nc = _pick_tile_nc(NC, H, W, block_budget)
    grid = (pl.cdiv(NC, tile_nc),)

    kernel = functools.partial(
        _unsharp_kernel,
        weights=weights,
        pad_front=pad_front,
        pad_rear=pad_rear,
        roll_w=(W % 128 == 0),     # lane-axis rolls only on natively tiled W
        roll_h=(H % 8 == 0),       # sublane-axis rolls only on natively tiled H
    )

    out = pl.pallas_call(
        kernel,
        out_shape=jax.ShapeDtypeStruct((NC, H, W), a.dtype),
        grid_spec=pltpu.PrefetchScalarGridSpec(
            num_scalar_prefetch=0,
            grid=grid,
            in_specs=[pl.BlockSpec((tile_nc, H, W), lambda i: (i, 0, 0))],
            out_specs=pl.BlockSpec((tile_nc, H, W), lambda i: (i, 0, 0)),
        ),
        compiler_params=pltpu.CompilerParams(
            dimension_semantics=("parallel",),
            vmem_limit_bytes=vmem_limit,
        ),
    )(x)
    return out.reshape(N, C, H, W)


def _reference(a: jax.Array, sigma: float) -> jax.Array:
    """Pure-JAX reference (same math) for a correctness check."""
    size = int(4 * sigma) + 1
    target = size + 1
    N, C, H, W = a.shape
    a = jnp.pad(a, ((0, 0), (0, 0), (0, max(0, target - H)), (0, max(0, target - W))))
    N, C, H, W = a.shape
    w = jnp.asarray(_gaussian_kernel_1d(size, sigma), jnp.float32)
    pf = (size - 1) // 2
    pr = (size - 1) - pf
    xp = jnp.pad(a.astype(jnp.float32), ((0, 0), (0, 0), (pf, pr), (pf, pr)),
                 mode="reflect")
    hb = sum(w[k] * xp[:, :, :, k:k + W] for k in range(size))
    vb = sum(w[k] * hb[:, :, k:k + H, :] for k in range(size))
    return (a.astype(jnp.float32) - vb).astype(a.dtype)


if __name__ == "__main__":
    key = jax.random.PRNGKey(0)
    cases = [
        ((2, 4, 16, 128), 1.0),   # natively tiled: roll fast path on both axes
        ((2, 4, 16, 16), 1.0),    # W not lane-tiled: roll rows, legacy cols
        ((1, 1, 3, 4), 1.0),      # ensure_size zero-pad to 6x6, legacy both axes
    ]
    for i, (shape, sigma) in enumerate(cases):
        k = jax.random.fold_in(key, i)
        x = jax.random.normal(k, shape, dtype=jnp.float32)

        out = jax.block_until_ready(unsharp_mask(x, sigma))
        ref = jax.block_until_ready(_reference(x, sigma))

        assert out.shape == ref.shape and out.dtype == ref.dtype, f"case {i} shape/dtype"
        assert jnp.allclose(out, ref, atol=1e-5, rtol=1e-5), f"case {i} mismatch"

    print("KERNEL_OK")
</pallas_src>

<mosaic_0001>
module attributes {stable_mosaic.version = 11 : i64} {
  func.func @_unsharp_kernel(%arg0: i32, %arg1: memref<4x16x128xf32, #tpu.memory_space<vmem>>, %arg2: memref<4x16x128xf32, #tpu.memory_space<vmem>>) attributes {dimension_semantics = [#tpu.dimension_semantics<parallel>], iteration_bounds = array<i64: 2>, scalar_prefetch = 0 : i64, scratch_operands = 0 : i64, tpu.core_type = #tpu.core_type<tc>, window_params = [{transform_indices = @transform_0, window_bounds = array<i64: 4, 16, 128>}, {transform_indices = @transform_1, window_bounds = array<i64: 4, 16, 128>}]} {
    %c0 = arith.constant 0 : index
    %c0_0 = arith.constant 0 : index
    %c0_1 = arith.constant 0 : index
    %0 = vector.load %arg1[%c0, %c0_0, %c0_1] : memref<4x16x128xf32, #tpu.memory_space<vmem>>, vector<1x16x128xf32>
    %1 = vector.shape_cast %0 : vector<1x16x128xf32> to vector<16x128xf32>
    %c2_i32 = arith.constant 2 : i32
    %2 = tpu.dynamic_rotate %1 by %c2_i32 dim 1 : vector<16x128xf32>, i32 -> vector<16x128xf32>
    %c126_i32 = arith.constant 126 : i32
    %3 = tpu.dynamic_rotate %1 by %c126_i32 dim 1 : vector<16x128xf32>, i32 -> vector<16x128xf32>
    %4 = arith.addf %2, %3 : vector<16x128xf32>
    %cst = arith.constant 0.054488685 : f32
    %5 = vector.broadcast %cst : f32 to vector<16x128xf32>
    %6 = arith.mulf %5, %4 : vector<16x128xf32>
    %c1_i32 = arith.constant 1 : i32
    %7 = tpu.dynamic_rotate %1 by %c1_i32 dim 1 : vector<16x128xf32>, i32 -> vector<16x128xf32>
    %c127_i32 = arith.constant 127 : i32
    %8 = tpu.dynamic_rotate %1 by %c127_i32 dim 1 : vector<16x128xf32>, i32 -> vector<16x128xf32>
    %9 = arith.addf %7, %8 : vector<16x128xf32>
    %cst_2 = arith.constant 0.244201347 : f32
    %10 = vector.broadcast %cst_2 : f32 to vector<16x128xf32>
    %11 = arith.mulf %10, %9 : vector<16x128xf32>
    %12 = arith.addf %6, %11 : vector<16x128xf32>
    %cst_3 = arith.constant 0.402619958 : f32
    %13 = vector.broadcast %cst_3 : f32 to vector<16x128xf32>
    %14 = arith.mulf %13, %1 : vector<16x128xf32>
    %15 = arith.addf %12, %14 : vector<16x128xf32>
    %16 = tpu.iota {dimensions = array<i32: 1>} : vector<1x128xi32>
    %c0_i32 = arith.constant 0 : i32
    %17 = vector.broadcast %c0_i32 : i32 to vector<1x128xi32>
    %18 = arith.cmpi eq, %16, %17 : vector<1x128xi32>
    %19 = vector.extract_strided_slice %1 {offsets = [0, 0], sizes = [16, 1], strides = [1, 1]} : vector<16x128xf32> to vector<16x1xf32>
    %cst_4 = arith.constant 0.402619958 : f32
    %20 = vector.broadcast %cst_4 : f32 to vector<16x1xf32>
    %21 = arith.mulf %20, %19 : vector<16x1xf32>
    %22 = vector.extract_strided_slice %1 {offsets = [0, 1], sizes = [16, 1], strides = [1, 1]} : vector<16x128xf32> to vector<16x1xf32>
    %cst_5 = arith.constant 0.488402694 : f32
    %23 = vector.broadcast %cst_5 : f32 to vector<16x1xf32>
    %24 = arith.mulf %23, %22 : vector<16x1xf32>
    %25 = arith.addf %21, %24 : vector<16x1xf32>
    %26 = vector.extract_strided_slice %1 {offsets = [0, 2], sizes = [16, 1], strides = [1, 1]} : vector<16x128xf32> to vector<16x1xf32>
    %cst_6 = arith.constant 0.10897737 : f32
    %27 = vector.broadcast %cst_6 : f32 to vector<16x1xf32>
    %28 = arith.mulf %27, %26 : vector<16x1xf32>
    %29 = arith.addf %25, %28 : vector<16x1xf32>
    %30 = vector.shape_cast %18 : vector<1x128xi1> to vector<1x128xi1>
    %31 = vector.broadcast %30 : vector<1x128xi1> to vector<16x128xi1>
    %32 = vector.shape_cast %29 : vector<16x1xf32> to vector<16x1xf32>
    %33 = vector.broadcast %32 : vector<16x1xf32> to vector<16x128xf32>
    %34 = arith.select %31, %33, %15 : vector<16x128xi1>, vector<16x128xf32>
    %c1_i32_7 = arith.constant 1 : i32
    %35 = vector.broadcast %c1_i32_7 : i32 to vector<1x128xi32>
    %36 = arith.cmpi eq, %16, %35 : vector<1x128xi32>
    %37 = vector.extract_strided_slice %1 {offsets = [0, 0], sizes = [16, 1], strides = [1, 1]} : vector<16x128xf32> to vector<16x1xf32>
    %cst_8 = arith.constant 0.244201347 : f32
    %38 = vector.broadcast %cst_8 : f32 to vector<16x1xf32>
    %39 = arith.mulf %38, %37 : vector<16x1xf32>
    %40 = vector.extract_strided_slice %1 {offsets = [0, 1], sizes = [16, 1], strides = [1, 1]} : vector<16x128xf32> to vector<16x1xf32>
    %cst_9 = arith.constant 0.457108617 : f32
    %41 = vector.broadcast %cst_9 : f32 to vector<16x1xf32>
    %42 = arith.mulf %41, %40 : vector<16x1xf32>
    %43 = arith.addf %39, %42 : vector<16x1xf32>
    %44 = vector.extract_strided_slice %1 {offsets = [0, 2], sizes = [16, 1], strides = [1, 1]} : vector<16x128xf32> to vector<16x1xf32>
    %cst_10 = arith.constant 0.244201347 : f32
    %45 = vector.broadcast %cst_10 : f32 to vector<16x1xf32>
    %46 = arith.mulf %45, %44 : vector<16x1xf32>
    %47 = arith.addf %43, %46 : vector<16x1xf32>
    %48 = vector.extract_strided_slice %1 {offsets = [0, 3], sizes = [16, 1], strides = [1, 1]} : vector<16x128xf32> to vector<16x1xf32>
    %cst_11 = arith.constant 0.054488685 : f32
    %49 = vector.broadcast %cst_11 : f32 to vector<16x1xf32>
    %50 = arith.mulf %49, %48 : vector<16x1xf32>
    %51 = arith.addf %47, %50 : vector<16x1xf32>
    %52 = vector.shape_cast %36 : vector<1x128xi1> to vector<1x128xi1>
    %53 = vector.broadcast %52 : vector<1x128xi1> to vector<16x128xi1>
    %54 = vector.shape_cast %51 : vector<16x1xf32> to vector<16x1xf32>
    %55 = vector.broadcast %54 : vector<16x1xf32> to vector<16x128xf32>
    %56 = arith.select %53, %55, %34 : vector<16x128xi1>, vector<16x128xf32>
    %c126_i32_12 = arith.constant 126 : i32
    %57 = vector.broadcast %c126_i32_12 : i32 to vector<1x128xi32>
    %58 = arith.cmpi eq, %16, %57 : vector<1x128xi32>
    %59 = vector.extract_strided_slice %1 {offsets = [0, 124], sizes = [16, 1], strides = [1, 1]} : vector<16x128xf32> to vector<16x1xf32>
    %cst_13 = arith.constant 0.054488685 : f32
    %60 = vector.broadcast %cst_13 : f32 to vector<16x1xf32>
    %61 = arith.mulf %60, %59 : vector<16x1xf32>
    %62 = vector.extract_strided_slice %1 {offsets = [0, 125], sizes = [16, 1], strides = [1, 1]} : vector<16x128xf32> to vector<16x1xf32>
    %cst_14 = arith.constant 0.244201347 : f32
    %63 = vector.broadcast %cst_14 : f32 to vector<16x1xf32>
    %64 = arith.mulf %63, %62 : vector<16x1xf32>
    %65 = arith.addf %61, %64 : vector<16x1xf32>
    %66 = vector.extract_strided_slice %1 {offsets = [0, 126], sizes = [16, 1], strides = [1, 1]} : vector<16x128xf32> to vector<16x1xf32>
    %cst_15 = arith.constant 0.457108617 : f32
    %67 = vector.broadcast %cst_15 : f32 to vector<16x1xf32>
    %68 = arith.mulf %67, %66 : vector<16x1xf32>
    %69 = arith.addf %65, %68 : vector<16x1xf32>
    %70 = vector.extract_strided_slice %1 {offsets = [0, 127], sizes = [16, 1], strides = [1, 1]} : vector<16x128xf32> to vector<16x1xf32>
    %cst_16 = arith.constant 0.244201347 : f32
    %71 = vector.broadcast %cst_16 : f32 to vector<16x1xf32>
    %72 = arith.mulf %71, %70 : vector<16x1xf32>
    %73 = arith.addf %69, %72 : vector<16x1xf32>
    %74 = vector.shape_cast %58 : vector<1x128xi1> to vector<1x128xi1>
    %75 = vector.broadcast %74 : vector<1x128xi1> to vector<16x128xi1>
    %76 = vector.shape_cast %73 : vector<16x1xf32> to vector<16x1xf32>
    %77 = vector.broadcast %76 : vector<16x1xf32> to vector<16x128xf32>
    %78 = arith.select %75, %77, %56 : vector<16x128xi1>, vector<16x128xf32>
    %c127_i32_17 = arith.constant 127 : i32
    %79 = vector.broadcast %c127_i32_17 : i32 to vector<1x128xi32>
    %80 = arith.cmpi eq, %16, %79 : vector<1x128xi32>
    %81 = vector.extract_strided_slice %1 {offsets = [0, 125], sizes = [16, 1], strides = [1, 1]} : vector<16x128xf32> to vector<16x1xf32>
    %cst_18 = arith.constant 0.10897737 : f32
    %82 = vector.broadcast %cst_18 : f32 to vector<16x1xf32>
    %83 = arith.mulf %82, %81 : vector<16x1xf32>
    %84 = vector.extract_strided_slice %1 {offsets = [0, 126], sizes = [16, 1], strides = [1, 1]} : vector<16x128xf32> to vector<16x1xf32>
    %cst_19 = arith.constant 0.488402694 : f32
    %85 = vector.broadcast %cst_19 : f32 to vector<16x1xf32>
    %86 = arith.mulf %85, %84 : vector<16x1xf32>
    %87 = arith.addf %83, %86 : vector<16x1xf32>
    %88 = vector.extract_strided_slice %1 {offsets = [0, 127], sizes = [16, 1], strides = [1, 1]} : vector<16x128xf32> to vector<16x1xf32>
    %cst_20 = arith.constant 0.402619958 : f32
    %89 = vector.broadcast %cst_20 : f32 to vector<16x1xf32>
    %90 = arith.mulf %89, %88 : vector<16x1xf32>
    %91 = arith.addf %87, %90 : vector<16x1xf32>
    %92 = vector.shape_cast %80 : vector<1x128xi1> to vector<1x128xi1>
    %93 = vector.broadcast %92 : vector<1x128xi1> to vector<16x128xi1>
    %94 = vector.shape_cast %91 : vector<16x1xf32> to vector<16x1xf32>
    %95 = vector.broadcast %94 : vector<16x1xf32> to vector<16x128xf32>
    %96 = arith.select %93, %95, %78 : vector<16x128xi1>, vector<16x128xf32>
    %c2_i32_21 = arith.constant 2 : i32
    %97 = tpu.dynamic_rotate %96 by %c2_i32_21 dim 0 : vector<16x128xf32>, i32 -> vector<16x128xf32>
    %c14_i32 = arith.constant 14 : i32
    %98 = tpu.dynamic_rotate %96 by %c14_i32 dim 0 : vector<16x128xf32>, i32 -> vector<16x128xf32>
    %99 = arith.addf %97, %98 : vector<16x128xf32>
    %cst_22 = arith.constant 0.054488685 : f32
    %100 = vector.broadcast %cst_22 : f32 to vector<16x128xf32>
    %101 = arith.mulf %100, %99 : vector<16x128xf32>
    %c1_i32_23 = arith.constant 1 : i32
    %102 = tpu.dynamic_rotate %96 by %c1_i32_23 dim 0 : vector<16x128xf32>, i32 -> vector<16x128xf32>
    %c15_i32 = arith.constant 15 : i32
    %103 = tpu.dynamic_rotate %96 by %c15_i32 dim 0 : vector<16x128xf32>, i32 -> vector<16x128xf32>
    %104 = arith.addf %102, %103 : vector<16x128xf32>
    %cst_24 = arith.constant 0.244201347 : f32
    %105 = vector.broadcast %cst_24 : f32 to vector<16x128xf32>
    %106 = arith.mulf %105, %104 : vector<16x128xf32>
    %107 = arith.addf %101, %106 : vector<16x128xf32>
    %cst_25 = arith.constant 0.402619958 : f32
    %108 = vector.broadcast %cst_25 : f32 to vector<16x128xf32>
    %109 = arith.mulf %108, %96 : vector<16x128xf32>
    %110 = arith.addf %107, %109 : vector<16x128xf32>
    %111 = tpu.iota {dimensions = array<i32: 0>} : vector<16x1xi32>
    %c0_i32_26 = arith.constant 0 : i32
    %112 = vector.broadcast %c0_i32_26 : i32 to vector<16x1xi32>
    %113 = arith.cmpi eq, %111, %112 : vector<16x1xi32>
    %114 = vector.extract_strided_slice %96 {offsets = [0, 0], sizes = [1, 128], strides = [1, 1]} : vector<16x128xf32> to vector<1x128xf32>
    %cst_27 = arith.constant 0.402619958 : f32
    %115 = vector.broadcast %cst_27 : f32 to vector<1x128xf32>
    %116 = arith.mulf %115, %114 : vector<1x128xf32>
    %117 = vector.extract_strided_slice %96 {offsets = [1, 0], sizes = [1, 128], strides = [1, 1]} : vector<16x128xf32> to vector<1x128xf32>
    %cst_28 = arith.constant 0.488402694 : f32
    %118 = vector.broadcast %cst_28 : f32 to vector<1x128xf32>
    %119 = arith.mulf %118, %117 : vector<1x128xf32>
    %120 = arith.addf %116, %119 : vector<1x128xf32>
    %121 = vector.extract_strided_slice %96 {offsets = [2, 0], sizes = [1, 128], strides = [1, 1]} : vector<16x128xf32> to vector<1x128xf32>
    %cst_29 = arith.constant 0.10897737 : f32
    %122 = vector.broadcast %cst_29 : f32 to vector<1x128xf32>
    %123 = arith.mulf %122, %121 : vector<1x128xf32>
    %124 = arith.addf %120, %123 : vector<1x128xf32>
    %125 = vector.shape_cast %113 : vector<16x1xi1> to vector<16x1xi1>
    %126 = vector.broadcast %125 : vector<16x1xi1> to vector<16x128xi1>
    %127 = vector.shape_cast %124 : vector<1x128xf32> to vector<1x128xf32>
    %128 = vector.broadcast %127 : vector<1x128xf32> to vector<16x128xf32>
    %129 = arith.select %126, %128, %110 : vector<16x128xi1>, vector<16x128xf32>
    %c1_i32_30 = arith.constant 1 : i32
    %130 = vector.broadcast %c1_i32_30 : i32 to vector<16x1xi32>
    %131 = arith.cmpi eq, %111, %130 : vector<16x1xi32>
    %132 = vector.extract_strided_slice %96 {offsets = [0, 0], sizes = [1, 128], strides = [1, 1]} : vector<16x128xf32> to vector<1x128xf32>
    %cst_31 = arith.constant 0.244201347 : f32
    %133 = vector.broadcast %cst_31 : f32 to vector<1x128xf32>
    %134 = arith.mulf %133, %132 : vector<1x128xf32>
    %135 = vector.extract_strided_slice %96 {offsets = [1, 0], sizes = [1, 128], strides = [1, 1]} : vector<16x128xf32> to vector<1x128xf32>
    %cst_32 = arith.constant 0.457108617 : f32
    %136 = vector.broadcast %cst_32 : f32 to vector<1x128xf32>
    %137 = arith.mulf %136, %135 : vector<1x128xf32>
    %138 = arith.addf %134, %137 : vector<1x128xf32>
    %139 = vector.extract_strided_slice %96 {offsets = [2, 0], sizes = [1, 128], strides = [1, 1]} : vector<16x128xf32> to vector<1x128xf32>
    %cst_33 = arith.constant 0.244201347 : f32
    %140 = vector.broadcast %cst_33 : f32 to vector<1x128xf32>
    %141 = arith.mulf %140, %139 : vector<1x128xf32>
    %142 = arith.addf %138, %141 : vector<1x128xf32>
    %143 = vector.extract_strided_slice %96 {offsets = [3, 0], sizes = [1, 128], strides = [1, 1]} : vector<16x128xf32> to vector<1x128xf32>
    %cst_34 = arith.constant 0.054488685 : f32
    %144 = vector.broadcast %cst_34 : f32 to vector<1x128xf32>
    %145 = arith.mulf %144, %143 : vector<1x128xf32>
    %146 = arith.addf %142, %145 : vector<1x128xf32>
    %147 = vector.shape_cast %131 : vector<16x1xi1> to vector<16x1xi1>
    %148 = vector.broadcast %147 : vector<16x1xi1> to vector<16x128xi1>
    %149 = vector.shape_cast %146 : vector<1x128xf32> to vector<1x128xf32>
    %150 = vector.broadcast %149 : vector<1x128xf32> to vector<16x128xf32>
    %151 = arith.select %148, %150, %129 : vector<16x128xi1>, vector<16x128xf32>
    %c14_i32_35 = arith.constant 14 : i32
    %152 = vector.broadcast %c14_i32_35 : i32 to vector<16x1xi32>
    %153 = arith.cmpi eq, %111, %152 : vector<16x1xi32>
    %154 = vector.extract_strided_slice %96 {offsets = [12, 0], sizes = [1, 128], strides = [1, 1]} : vector<16x128xf32> to vector<1x128xf32>
    %cst_36 = arith.constant 0.054488685 : f32
    %155 = vector.broadcast %cst_36 : f32 to vector<1x128xf32>
    %156 = arith.mulf %155, %154 : vector<1x128xf32>
    %157 = vector.extract_strided_slice %96 {offsets = [13, 0], sizes = [1, 128], strides = [1, 1]} : vector<16x128xf32> to vector<1x128xf32>
    %cst_37 = arith.constant 0.244201347 : f32
    %158 = vector.broadcast %cst_37 : f32 to vector<1x128xf32>
    %159 = arith.mulf %158, %157 : vector<1x128xf32>
    %160 = arith.addf %156, %159 : vector<1x128xf32>
    %161 = vector.extract_strided_slice %96 {offsets = [14, 0], sizes = [1, 128], strides = [1, 1]} : vector<16x128xf32> to vector<1x128xf32>
    %cst_38 = arith.constant 0.457108617 : f32
    %162 = vector.broadcast %cst_38 : f32 to vector<1x128xf32>
    %163 = arith.mulf %162, %161 : vector<1x128xf32>
    %164 = arith.addf %160, %163 : vector<1x128xf32>
    %165 = vector.extract_strided_slice %96 {offsets = [15, 0], sizes = [1, 128], strides = [1, 1]} : vector<16x128xf32> to vector<1x128xf32>
    %cst_39 = arith.constant 0.244201347 : f32
    %166 = vector.broadcast %cst_39 : f32 to vector<1x128xf32>
    %167 = arith.mulf %166, %165 : vector<1x128xf32>
    %168 = arith.addf %164, %167 : vector<1x128xf32>
    %169 = vector.shape_cast %153 : vector<16x1xi1> to vector<16x1xi1>
    %170 = vector.broadcast %169 : vector<16x1xi1> to vector<16x128xi1>
    %171 = vector.shape_cast %168 : vector<1x128xf32> to vector<1x128xf32>
    %172 = vector.broadcast %171 : vector<1x128xf32> to vector<16x128xf32>
    %173 = arith.select %170, %172, %151 : vector<16x128xi1>, vector<16x128xf32>
    %c15_i32_40 = arith.constant 15 : i32
    %174 = vector.broadcast %c15_i32_40 : i32 to vector<16x1xi32>
    %175 = arith.cmpi eq, %111, %174 : vector<16x1xi32>
    %176 = vector.extract_strided_slice %96 {offsets = [13, 0], sizes = [1, 128], strides = [1, 1]} : vector<16x128xf32> to vector<1x128xf32>
    %cst_41 = arith.constant 0.10897737 : f32
    %177 = vector.broadcast %cst_41 : f32 to vector<1x128xf32>
    %178 = arith.mulf %177, %176 : vector<1x128xf32>
    %179 = vector.extract_strided_slice %96 {offsets = [14, 0], sizes = [1, 128], strides = [1, 1]} : vector<16x128xf32> to vector<1x128xf32>
    %cst_42 = arith.constant 0.488402694 : f32
    %180 = vector.broadcast %cst_42 : f32 to vector<1x128xf32>
    %181 = arith.mulf %180, %179 : vector<1x128xf32>
    %182 = arith.addf %178, %181 : vector<1x128xf32>
    %183 = vector.extract_strided_slice %96 {offsets = [15, 0], sizes = [1, 128], strides = [1, 1]} : vector<16x128xf32> to vector<1x128xf32>
    %cst_43 = arith.constant 0.402619958 : f32
    %184 = vector.broadcast %cst_43 : f32 to vector<1x128xf32>
    %185 = arith.mulf %184, %183 : vector<1x128xf32>
    %186 = arith.addf %182, %185 : vector<1x128xf32>
    %187 = vector.shape_cast %175 : vector<16x1xi1> to vector<16x1xi1>
    %188 = vector.broadcast %187 : vector<16x1xi1> to vector<16x128xi1>
    %189 = vector.shape_cast %186 : vector<1x128xf32> to vector<1x128xf32>
    %190 = vector.broadcast %189 : vector<1x128xf32> to vector<16x128xf32>
    %191 = arith.select %188, %190, %173 : vector<16x128xi1>, vector<16x128xf32>
    %192 = arith.subf %1, %191 : vector<16x128xf32>
    %c0_44 = arith.constant 0 : index
    %c0_45 = arith.constant 0 : index
    %c0_46 = arith.constant 0 : index
    %193 = vector.load %arg2[%c0_44, %c0_45, %c0_46] : memref<4x16x128xf32, #tpu.memory_space<vmem>>, vector<1x16x128xf32>
    %194 = vector.shape_cast %193 : vector<1x16x128xf32> to vector<16x128xf32>
    %195 = vector.shape_cast %192 : vector<16x128xf32> to vector<1x16x128xf32>
    tpu.vector_store %arg2[%c0_44, %c0_45, %c0_46], %195 {strides = array<i32>} : memref<4x16x128xf32, #tpu.memory_space<vmem>>, vector<1x16x128xf32>,
    %c1 = arith.constant 1 : index
    %c0_47 = arith.constant 0 : index
    %c0_48 = arith.constant 0 : index
    %196 = vector.load %arg1[%c1, %c0_47, %c0_48] : memref<4x16x128xf32, #tpu.memory_space<vmem>>, vector<1x16x128xf32>
    %197 = vector.shape_cast %196 : vector<1x16x128xf32> to vector<16x128xf32>
    %c2_i32_49 = arith.constant 2 : i32
    %198 = tpu.dynamic_rotate %197 by %c2_i32_49 dim 1 : vector<16x128xf32>, i32 -> vector<16x128xf32>
    %c126_i32_50 = arith.constant 126 : i32
    %199 = tpu.dynamic_rotate %197 by %c126_i32_50 dim 1 : vector<16x128xf32>, i32 -> vector<16x128xf32>
    %200 = arith.addf %198, %199 : vector<16x128xf32>
    %cst_51 = arith.constant 0.054488685 : f32
    %201 = vector.broadcast %cst_51 : f32 to vector<16x128xf32>
    %202 = arith.mulf %201, %200 : vector<16x128xf32>
    %c1_i32_52 = arith.constant 1 : i32
    %203 = tpu.dynamic_rotate %197 by %c1_i32_52 dim 1 : vector<16x128xf32>, i32 -> vector<16x128xf32>
    %c127_i32_53 = arith.constant 127 : i32
    %204 = tpu.dynamic_rotate %197 by %c127_i32_53 dim 1 : vector<16x128xf32>, i32 -> vector<16x128xf32>
    %205 = arith.addf %203, %204 : vector<16x128xf32>
    %cst_54 = arith.constant 0.244201347 : f32
    %206 = vector.broadcast %cst_54 : f32 to vector<16x128xf32>
    %207 = arith.mulf %206, %205 : vector<16x128xf32>
    %208 = arith.addf %202, %207 : vector<16x128xf32>
    %cst_55 = arith.constant 0.402619958 : f32
    %209 = vector.broadcast %cst_55 : f32 to vector<16x128xf32>
    %210 = arith.mulf %209, %197 : vector<16x128xf32>
    %211 = arith.addf %208, %210 : vector<16x128xf32>
    %212 = tpu.iota {dimensions = array<i32: 1>} : vector<1x128xi32>
    %c0_i32_56 = arith.constant 0 : i32
    %213 = vector.broadcast %c0_i32_56 : i32 to vector<1x128xi32>
    %214 = arith.cmpi eq, %212, %213 : vector<1x128xi32>
    %215 = vector.extract_strided_slice %197 {offsets = [0, 0], sizes = [16, 1], strides = [1, 1]} : vector<16x128xf32> to vector<16x1xf32>
    %cst_57 = arith.constant 0.402619958 : f32
    %216 = vector.broadcast %cst_57 : f32 to vector<16x1xf32>
    %217 = arith.mulf %216, %215 : vector<16x1xf32>
    %218 = vector.extract_strided_slice %197 {offsets = [0, 1], sizes = [16, 1], strides = [1, 1]} : vector<16x128xf32> to vector<16x1xf32>
    %cst_58 = arith.constant 0.488402694 : f32
    %219 = vector.broadcast %cst_58 : f32 to vector<16x1xf32>
    %220 = arith.mulf %219, %218 : vector<16x1xf32>
    %221 = arith.addf %217, %220 : vector<16x1xf32>
    %222 = vector.extract_strided_slice %197 {offsets = [0, 2], sizes = [16, 1], strides = [1, 1]} : vector<16x128xf32> to vector<16x1xf32>
    %cst_59 = arith.constant 0.10897737 : f32
    %223 = vector.broadcast %cst_59 : f32 to vector<16x1xf32>
    %224 = arith.mulf %223, %222 : vector<16x1xf32>
    %225 = arith.addf %221, %224 : vector<16x1xf32>
    %226 = vector.shape_cast %214 : vector<1x128xi1> to vector<1x128xi1>
    %227 = vector.broadcast %226 : vector<1x128xi1> to vector<16x128xi1>
    %228 = vector.shape_cast %225 : vector<16x1xf32> to vector<16x1xf32>
    %229 = vector.broadcast %228 : vector<16x1xf32> to vector<16x128xf32>
    %230 = arith.select %227, %229, %211 : vector<16x128xi1>, vector<16x128xf32>
    %c1_i32_60 = arith.constant 1 : i32
    %231 = vector.broadcast %c1_i32_60 : i32 to vector<1x128xi32>
    %232 = arith.cmpi eq, %212, %231 : vector<1x128xi32>
    %233 = vector.extract_strided_slice %197 {offsets = [0, 0], sizes = [16, 1], strides = [1, 1]} : vector<16x128xf32> to vector<16x1xf32>
    %cst_61 = arith.constant 0.244201347 : f32
    %234 = vector.broadcast %cst_61 : f32 to vector<16x1xf32>
    %235 = arith.mulf %234, %233 : vector<16x1xf32>
    %236 = vector.extract_strided_slice %197 {offsets = [0, 1], sizes = [16, 1], strides = [1, 1]} : vector<16x128xf32> to vector<16x1xf32>
    %cst_62 = arith.constant 0.457108617 : f32
    %237 = vector.broadcast %cst_62 : f32 to vector<16x1xf32>
    %238 = arith.mulf %237, %236 : vector<16x1xf32>
    %239 = arith.addf %235, %238 : vector<16x1xf32>
    %240 = vector.extract_strided_slice %197 {offsets = [0, 2], sizes = [16, 1], strides = [1, 1]} : vector<16x128xf32> to vector<16x1xf32>
    %cst_63 = arith.constant 0.244201347 : f32
    %241 = vector.broadcast %cst_63 : f32 to vector<16x1xf32>
    %242 = arith.mulf %241, %240 : vector<16x1xf32>
    %243 = arith.addf %239, %242 : vector<16x1xf32>
    %244 = vector.extract_strided_slice %197 {offsets = [0, 3], sizes = [16, 1], strides = [1, 1]} : vector<16x128xf32> to vector<16x1xf32>
    %cst_64 = arith.constant 0.054488685 : f32
    %245 = vector.broadcast %cst_64 : f32 to vector<16x1xf32>
    %246 = arith.mulf %245, %244 : vector<16x1xf32>
    %247 = arith.addf %243, %246 : vector<16x1xf32>
    %248 = vector.shape_cast %232 : vector<1x128xi1> to vector<1x128xi1>
    %249 = vector.broadcast %248 : vector<1x128xi1> to vector<16x128xi1>
    %250 = vector.shape_cast %247 : vector<16x1xf32> to vector<16x1xf32>
    %251 = vector.broadcast %250 : vector<16x1xf32> to vector<16x128xf32>
    %252 = arith.select %249, %251, %230 : vector<16x128xi1>, vector<16x128xf32>
    %c126_i32_65 = arith.constant 126 : i32
    %253 = vector.broadcast %c126_i32_65 : i32 to vector<1x128xi32>
    %254 = arith.cmpi eq, %212, %253 : vector<1x128xi32>
    %255 = vector.extract_strided_slice %197 {offsets = [0, 124], sizes = [16, 1], strides = [1, 1]} : vector<16x128xf32> to vector<16x1xf32>
    %cst_66 = arith.constant 0.054488685 : f32
    %256 = vector.broadcast %cst_66 : f32 to vector<16x1xf32>
    %257 = arith.mulf %256, %255 : vector<16x1xf32>
    %258 = vector.extract_strided_slice %197 {offsets = [0, 125], sizes = [16, 1], strides = [1, 1]} : vector<16x128xf32> to vector<16x1xf32>
    %cst_67 = arith.constant 0.244201347 : f32
    %259 = vector.broadcast %cst_67 : f32 to vector<16x1xf32>
    %260 = arith.mulf %259, %258 : vector<16x1xf32>
    %261 = arith.addf %257, %260 : vector<16x1xf32>
    %262 = vector.extract_strided_slice %197 {offsets = [0, 126], sizes = [16, 1], strides = [1, 1]} : vector<16x128xf32> to vector<16x1xf32>
    %cst_68 = arith.constant 0.457108617 : f32
    %263 = vector.broadcast %cst_68 : f32 to vector<16x1xf32>
    %264 = arith.mulf %263, %262 : vector<16x1xf32>
    %265 = arith.addf %261, %264 : vector<16x1xf32>
    %266 = vector.extract_strided_slice %197 {offsets = [0, 127], sizes = [16, 1], strides = [1, 1]} : vector<16x128xf32> to vector<16x1xf32>
    %cst_69 = arith.constant 0.244201347 : f32
    %267 = vector.broadcast %cst_69 : f32 to vector<16x1xf32>
    %268 = arith.mulf %267, %266 : vector<16x1xf32>
    %269 = arith.addf %265, %268 : vector<16x1xf32>
    %270 = vector.shape_cast %254 : vector<1x128xi1> to vector<1x128xi1>
    %271 = vector.broadcast %270 : vector<1x128xi1> to vector<16x128xi1>
    %272 = vector.shape_cast %269 : vector<16x1xf32> to vector<16x1xf32>
    %273 = vector.broadcast %272 : vector<16x1xf32> to vector<16x128xf32>
    %274 = arith.select %271, %273, %252 : vector<16x128xi1>, vector<16x128xf32>
    %c127_i32_70 = arith.constant 127 : i32
    %275 = vector.broadcast %c127_i32_70 : i32 to vector<1x128xi32>
    %276 = arith.cmpi eq, %212, %275 : vector<1x128xi32>
    %277 = vector.extract_strided_slice %197 {offsets = [0, 125], sizes = [16, 1], strides = [1, 1]} : vector<16x128xf32> to vector<16x1xf32>
    %cst_71 = arith.constant 0.10897737 : f32
    %278 = vector.broadcast %cst_71 : f32 to vector<16x1xf32>
    %279 = arith.mulf %278, %277 : vector<16x1xf32>
    %280 = vector.extract_strided_slice %197 {offsets = [0, 126], sizes = [16, 1], strides = [1, 1]} : vector<16x128xf32> to vector<16x1xf32>
    %cst_72 = arith.constant 0.488402694 : f32
    %281 = vector.broadcast %cst_72 : f32 to vector<16x1xf32>
    %282 = arith.mulf %281, %280 : vector<16x1xf32>
    %283 = arith.addf %279, %282 : vector<16x1xf32>
    %284 = vector.extract_strided_slice %197 {offsets = [0, 127], sizes = [16, 1], strides = [1, 1]} : vector<16x128xf32> to vector<16x1xf32>
    %cst_73 = arith.constant 0.402619958 : f32
    %285 = vector.broadcast %cst_73 : f32 to vector<16x1xf32>
    %286 = arith.mulf %285, %284 : vector<16x1xf32>
    %287 = arith.addf %283, %286 : vector<16x1xf32>
    %288 = vector.shape_cast %276 : vector<1x128xi1> to vector<1x128xi1>
    %289 = vector.broadcast %288 : vector<1x128xi1> to vector<16x128xi1>
    %290 = vector.shape_cast %287 : vector<16x1xf32> to vector<16x1xf32>
    %291 = vector.broadcast %290 : vector<16x1xf32> to vector<16x128xf32>
    %292 = arith.select %289, %291, %274 : vector<16x128xi1>, vector<16x128xf32>
    %c2_i32_74 = arith.constant 2 : i32
    %293 = tpu.dynamic_rotate %292 by %c2_i32_74 dim 0 : vector<16x128xf32>, i32 -> vector<16x128xf32>
    %c14_i32_75 = arith.constant 14 : i32
    %294 = tpu.dynamic_rotate %292 by %c14_i32_75 dim 0 : vector<16x128xf32>, i32 -> vector<16x128xf32>
    %295 = arith.addf %293, %294 : vector<16x128xf32>
    %cst_76 = arith.constant 0.054488685 : f32
    %296 = vector.broadcast %cst_76 : f32 to vector<16x128xf32>
    %297 = arith.mulf %296, %295 : vector<16x128xf32>
    %c1_i32_77 = arith.constant 1 : i32
    %298 = tpu.dynamic_rotate %292 by %c1_i32_77 dim 0 : vector<16x128xf32>, i32 -> vector<16x128xf32>
    %c15_i32_78 = arith.constant 15 : i32
    %299 = tpu.dynamic_rotate %292 by %c15_i32_78 dim 0 : vector<16x128xf32>, i32 -> vector<16x128xf32>
    %300 = arith.addf %298, %299 : vector<16x128xf32>
    %cst_79 = arith.constant 0.244201347 : f32
    %301 = vector.broadcast %cst_79 : f32 to vector<16x128xf32>
    %302 = arith.mulf %301, %300 : vector<16x128xf32>
    %303 = arith.addf %297, %302 : vector<16x128xf32>
    %cst_80 = arith.constant 0.402619958 : f32
    %304 = vector.broadcast %cst_80 : f32 to vector<16x128xf32>
    %305 = arith.mulf %304, %292 : vector<16x128xf32>
    %306 = arith.addf %303, %305 : vector<16x128xf32>
    %307 = tpu.iota {dimensions = array<i32: 0>} : vector<16x1xi32>
    %c0_i32_81 = arith.constant 0 : i32
    %308 = vector.broadcast %c0_i32_81 : i32 to vector<16x1xi32>
    %309 = arith.cmpi eq, %307, %308 : vector<16x1xi32>
    %310 = vector.extract_strided_slice %292 {offsets = [0, 0], sizes = [1, 128], strides = [1, 1]} : vector<16x128xf32> to vector<1x128xf32>
    %cst_82 = arith.constant 0.402619958 : f32
    %311 = vector.broadcast %cst_82 : f32 to vector<1x128xf32>
    %312 = arith.mulf %311, %310 : vector<1x128xf32>
    %313 = vector.extract_strided_slice %292 {offsets = [1, 0], sizes = [1, 128], strides = [1, 1]} : vector<16x128xf32> to vector<1x128xf32>
    %cst_83 = arith.constant 0.488402694 : f32
    %314 = vector.broadcast %cst_83 : f32 to vector<1x128xf32>
    %315 = arith.mulf %314, %313 : vector<1x128xf32>
    %316 = arith.addf %312, %315 : vector<1x128xf32>
    %317 = vector.extract_strided_slice %292 {offsets = [2, 0], sizes = [1, 128], strides = [1, 1]} : vector<16x128xf32> to vector<1x128xf32>
    %cst_84 = arith.constant 0.10897737 : f32
    %318 = vector.broadcast %cst_84 : f32 to vector<1x128xf32>
    %319 = arith.mulf %318, %317 : vector<1x128xf32>
    %320 = arith.addf %316, %319 : vector<1x128xf32>
    %321 = vector.shape_cast %309 : vector<16x1xi1> to vector<16x1xi1>
    %322 = vector.broadcast %321 : vector<16x1xi1> to vector<16x128xi1>
    %323 = vector.shape_cast %320 : vector<1x128xf32> to vector<1x128xf32>
    %324 = vector.broadcast %323 : vector<1x128xf32> to vector<16x128xf32>
    %325 = arith.select %322, %324, %306 : vector<16x128xi1>, vector<16x128xf32>
    %c1_i32_85 = arith.constant 1 : i32
    %326 = vector.broadcast %c1_i32_85 : i32 to vector<16x1xi32>
    %327 = arith.cmpi eq, %307, %326 : vector<16x1xi32>
    %328 = vector.extract_strided_slice %292 {offsets = [0, 0], sizes = [1, 128], strides = [1, 1]} : vector<16x128xf32> to vector<1x128xf32>
    %cst_86 = arith.constant 0.244201347 : f32
    %329 = vector.broadcast %cst_86 : f32 to vector<1x128xf32>
    %330 = arith.mulf %329, %328 : vector<1x128xf32>
    %331 = vector.extract_strided_slice %292 {offsets = [1, 0], sizes = [1, 128], strides = [1, 1]} : vector<16x128xf32> to vector<1x128xf32>
    %cst_87 = arith.constant 0.457108617 : f32
    %332 = vector.broadcast %cst_87 : f32 to vector<1x128xf32>
    %333 = arith.mulf %332, %331 : vector<1x128xf32>
    %334 = arith.addf %330, %333 : vector<1x128xf32>
    %335 = vector.extract_strided_slice %292 {offsets = [2, 0], sizes = [1, 128], strides = [1, 1]} : vector<16x128xf32> to vector<1x128xf32>
    %cst_88 = arith.constant 0.244201347 : f32
    %336 = vector.broadcast %cst_88 : f32 to vector<1x128xf32>
    %337 = arith.mulf %336, %335 : vector<1x128xf32>
    %338 = arith.addf %334, %337 : vector<1x128xf32>
    %339 = vector.extract_strided_slice %292 {offsets = [3, 0], sizes = [1, 128], strides = [1, 1]} : vector<16x128xf32> to vector<1x128xf32>
    %cst_89 = arith.constant 0.054488685 : f32
    %340 = vector.broadcast %cst_89 : f32 to vector<1x128xf32>
    %341 = arith.mulf %340, %339 : vector<1x128xf32>
    %342 = arith.addf %338, %341 : vector<1x128xf32>
    %343 = vector.shape_cast %327 : vector<16x1xi1> to vector<16x1xi1>
    %344 = vector.broadcast %343 : vector<16x1xi1> to vector<16x128xi1>
    %345 = vector.shape_cast %342 : vector<1x128xf32> to vector<1x128xf32>
    %346 = vector.broadcast %345 : vector<1x128xf32> to vector<16x128xf32>
    %347 = arith.select %344, %346, %325 : vector<16x128xi1>, vector<16x128xf32>
    %c14_i32_90 = arith.constant 14 : i32
    %348 = vector.broadcast %c14_i32_90 : i32 to vector<16x1xi32>
    %349 = arith.cmpi eq, %307, %348 : vector<16x1xi32>
    %350 = vector.extract_strided_slice %292 {offsets = [12, 0], sizes = [1, 128], strides = [1, 1]} : vector<16x128xf32> to vector<1x128xf32>
    %cst_91 = arith.constant 0.054488685 : f32
    %351 = vector.broadcast %cst_91 : f32 to vector<1x128xf32>
    %352 = arith.mulf %351, %350 : vector<1x128xf32>
    %353 = vector.extract_strided_slice %292 {offsets = [13, 0], sizes = [1, 128], strides = [1, 1]} : vector<16x128xf32> to vector<1x128xf32>
    %cst_92 = arith.constant 0.244201347 : f32
    %354 = vector.broadcast %cst_92 : f32 to vector<1x128xf32>
    %355 = arith.mulf %354, %353 : vector<1x128xf32>
    %356 = arith.addf %352, %355 : vector<1x128xf32>
    %357 = vector.extract_strided_slice %292 {offsets = [14, 0], sizes = [1, 128], strides = [1, 1]} : vector<16x128xf32> to vector<1x128xf32>
    %cst_93 = arith.constant 0.457108617 : f32
    %358 = vector.broadcast %cst_93 : f32 to vector<1x128xf32>
    %359 = arith.mulf %358, %357 : vector<1x128xf32>
    %360 = arith.addf %356, %359 : vector<1x128xf32>
    %361 = vector.extract_strided_slice %292 {offsets = [15, 0], sizes = [1, 128], strides = [1, 1]} : vector<16x128xf32> to vector<1x128xf32>
    %cst_94 = arith.constant 0.244201347 : f32
    %362 = vector.broadcast %cst_94 : f32 to vector<1x128xf32>
    %363 = arith.mulf %362, %361 : vector<1x128xf32>
    %364 = arith.addf %360, %363 : vector<1x128xf32>
    %365 = vector.shape_cast %349 : vector<16x1xi1> to vector<16x1xi1>
    %366 = vector.broadcast %365 : vector<16x1xi1> to vector<16x128xi1>
    %367 = vector.shape_cast %364 : vector<1x128xf32> to vector<1x128xf32>
    %368 = vector.broadcast %367 : vector<1x128xf32> to vector<16x128xf32>
    %369 = arith.select %366, %368, %347 : vector<16x128xi1>, vector<16x128xf32>
    %c15_i32_95 = arith.constant 15 : i32
    %370 = vector.broadcast %c15_i32_95 : i32 to vector<16x1xi32>
    %371 = arith.cmpi eq, %307, %370 : vector<16x1xi32>
    %372 = vector.extract_strided_slice %292 {offsets = [13, 0], sizes = [1, 128], strides = [1, 1]} : vector<16x128xf32> to vector<1x128xf32>
    %cst_96 = arith.constant 0.10897737 : f32
    %373 = vector.broadcast %cst_96 : f32 to vector<1x128xf32>
    %374 = arith.mulf %373, %372 : vector<1x128xf32>
    %375 = vector.extract_strided_slice %292 {offsets = [14, 0], sizes = [1, 128], strides = [1, 1]} : vector<16x128xf32> to vector<1x128xf32>
    %cst_97 = arith.constant 0.488402694 : f32
    %376 = vector.broadcast %cst_97 : f32 to vector<1x128xf32>
    %377 = arith.mulf %376, %375 : vector<1x128xf32>
    %378 = arith.addf %374, %377 : vector<1x128xf32>
    %379 = vector.extract_strided_slice %292 {offsets = [15, 0], sizes = [1, 128], strides = [1, 1]} : vector<16x128xf32> to vector<1x128xf32>
    %cst_98 = arith.constant 0.402619958 : f32
    %380 = vector.broadcast %cst_98 : f32 to vector<1x128xf32>
    %381 = arith.mulf %380, %379 : vector<1x128xf32>
    %382 = arith.addf %378, %381 : vector<1x128xf32>
    %383 = vector.shape_cast %371 : vector<16x1xi1> to vector<16x1xi1>
    %384 = vector.broadcast %383 : vector<16x1xi1> to vector<16x128xi1>
    %385 = vector.shape_cast %382 : vector<1x128xf32> to vector<1x128xf32>
    %386 = vector.broadcast %385 : vector<1x128xf32> to vector<16x128xf32>
    %387 = arith.select %384, %386, %369 : vector<16x128xi1>, vector<16x128xf32>
    %388 = arith.subf %197, %387 : vector<16x128xf32>
    %c1_99 = arith.constant 1 : index
    %c0_100 = arith.constant 0 : index
    %c0_101 = arith.constant 0 : index
    %389 = vector.load %arg2[%c1_99, %c0_100, %c0_101] : memref<4x16x128xf32, #tpu.memory_space<vmem>>, vector<1x16x128xf32>
    %390 = vector.shape_cast %389 : vector<1x16x128xf32> to vector<16x128xf32>
    %391 = vector.shape_cast %388 : vector<16x128xf32> to vector<1x16x128xf32>
    tpu.vector_store %arg2[%c1_99, %c0_100, %c0_101], %391 {strides = array<i32>} : memref<4x16x128xf32, #tpu.memory_space<vmem>>, vector<1x16x128xf32>,
    %c2 = arith.constant 2 : index
    %c0_102 = arith.constant 0 : index
    %c0_103 = arith.constant 0 : index
    %392 = vector.load %arg1[%c2, %c0_102, %c0_103] : memref<4x16x128xf32, #tpu.memory_space<vmem>>, vector<1x16x128xf32>
    %393 = vector.shape_cast %392 : vector<1x16x128xf32> to vector<16x128xf32>
    %c2_i32_104 = arith.constant 2 : i32
    %394 = tpu.dynamic_rotate %393 by %c2_i32_104 dim 1 : vector<16x128xf32>, i32 -> vector<16x128xf32>
    %c126_i32_105 = arith.constant 126 : i32
    %395 = tpu.dynamic_rotate %393 by %c126_i32_105 dim 1 : vector<16x128xf32>, i32 -> vector<16x128xf32>
    %396 = arith.addf %394, %395 : vector<16x128xf32>
    %cst_106 = arith.constant 0.054488685 : f32
    %397 = vector.broadcast %cst_106 : f32 to vector<16x128xf32>
    %398 = arith.mulf %397, %396 : vector<16x128xf32>
    %c1_i32_107 = arith.constant 1 : i32
    %399 = tpu.dynamic_rotate %393 by %c1_i32_107 dim 1 : vector<16x128xf32>, i32 -> vector<16x128xf32>
    %c127_i32_108 = arith.constant 127 : i32
    %400 = tpu.dynamic_rotate %393 by %c127_i32_108 dim 1 : vector<16x128xf32>, i32 -> vector<16x128xf32>
    %401 = arith.addf %399, %400 : vector<16x128xf32>
    %cst_109 = arith.constant 0.244201347 : f32
    %402 = vector.broadcast %cst_109 : f32 to vector<16x128xf32>
    %403 = arith.mulf %402, %401 : vector<16x128xf32>
    %404 = arith.addf %398, %403 : vector<16x128xf32>
    %cst_110 = arith.constant 0.402619958 : f32
    %405 = vector.broadcast %cst_110 : f32 to vector<16x128xf32>
    %406 = arith.mulf %405, %393 : vector<16x128xf32>
    %407 = arith.addf %404, %406 : vector<16x128xf32>
    %408 = tpu.iota {dimensions = array<i32: 1>} : vector<1x128xi32>
    %c0_i32_111 = arith.constant 0 : i32
    %409 = vector.broadcast %c0_i32_111 : i32 to vector<1x128xi32>
    %410 = arith.cmpi eq, %408, %409 : vector<1x128xi32>
    %411 = vector.extract_strided_slice %393 {offsets = [0, 0], sizes = [16, 1], strides = [1, 1]} : vector<16x128xf32> to vector<16x1xf32>
    %cst_112 = arith.constant 0.402619958 : f32
    %412 = vector.broadcast %cst_112 : f32 to vector<16x1xf32>
    %413 = arith.mulf %412, %411 : vector<16x1xf32>
    %414 = vector.extract_strided_slice %393 {offsets = [0, 1], sizes = [16, 1], strides = [1, 1]} : vector<16x128xf32> to vector<16x1xf32>
    %cst_113 = arith.constant 0.488402694 : f32
    %415 = vector.broadcast %cst_113 : f32 to vector<16x1xf32>
    %416 = arith.mulf %415, %414 : vector<16x1xf32>
    %417 = arith.addf %413, %416 : vector<16x1xf32>
    %418 = vector.extract_strided_slice %393 {offsets = [0, 2], sizes = [16, 1], strides = [1, 1]} : vector<16x128xf32> to vector<16x1xf32>
    %cst_114 = arith.constant 0.10897737 : f32
    %419 = vector.broadcast %cst_114 : f32 to vector<16x1xf32>
    %420 = arith.mulf %419, %418 : vector<16x1xf32>
    %421 = arith.addf %417, %420 : vector<16x1xf32>
    %422 = vector.shape_cast %410 : vector<1x128xi1> to vector<1x128xi1>
    %423 = vector.broadcast %422 : vector<1x128xi1> to vector<16x128xi1>
    %424 = vector.shape_cast %421 : vector<16x1xf32> to vector<16x1xf32>
    %425 = vector.broadcast %424 : vector<16x1xf32> to vector<16x128xf32>
    %426 = arith.select %423, %425, %407 : vector<16x128xi1>, vector<16x128xf32>
    %c1_i32_115 = arith.constant 1 : i32
    %427 = vector.broadcast %c1_i32_115 : i32 to vector<1x128xi32>
    %428 = arith.cmpi eq, %408, %427 : vector<1x128xi32>
    %429 = vector.extract_strided_slice %393 {offsets = [0, 0], sizes = [16, 1], strides = [1, 1]} : vector<16x128xf32> to vector<16x1xf32>
    %cst_116 = arith.constant 0.244201347 : f32
    %430 = vector.broadcast %cst_116 : f32 to vector<16x1xf32>
    %431 = arith.mulf %430, %429 : vector<16x1xf32>
    %432 = vector.extract_strided_slice %393 {offsets = [0, 1], sizes = [16, 1], strides = [1, 1]} : vector<16x128xf32> to vector<16x1xf32>
    %cst_117 = arith.constant 0.457108617 : f32
    %433 = vector.broadcast %cst_117 : f32 to vector<16x1xf32>
    %434 = arith.mulf %433, %432 : vector<16x1xf32>
    %435 = arith.addf %431, %434 : vector<16x1xf32>
    %436 = vector.extract_strided_slice %393 {offsets = [0, 2], sizes = [16, 1], strides = [1, 1]} : vector<16x128xf32> to vector<16x1xf32>
    %cst_118 = arith.constant 0.244201347 : f32
    %437 = vector.broadcast %cst_118 : f32 to vector<16x1xf32>
    %438 = arith.mulf %437, %436 : vector<16x1xf32>
    %439 = arith.addf %435, %438 : vector<16x1xf32>
    %440 = vector.extract_strided_slice %393 {offsets = [0, 3], sizes = [16, 1], strides = [1, 1]} : vector<16x128xf32> to vector<16x1xf32>
    %cst_119 = arith.constant 0.054488685 : f32
    %441 = vector.broadcast %cst_119 : f32 to vector<16x1xf32>
    %442 = arith.mulf %441, %440 : vector<16x1xf32>
    %443 = arith.addf %439, %442 : vector<16x1xf32>
    %444 = vector.shape_cast %428 : vector<1x128xi1> to vector<1x128xi1>
    %445 = vector.broadcast %444 : vector<1x128xi1> to vector<16x128xi1>
    %446 = vector.shape_cast %443 : vector<16x1xf32> to vector<16x1xf32>
    %447 = vector.broadcast %446 : vector<16x1xf32> to vector<16x128xf32>
    %448 = arith.select %445, %447, %426 : vector<16x128xi1>, vector<16x128xf32>
    %c126_i32_120 = arith.constant 126 : i32
    %449 = vector.broadcast %c126_i32_120 : i32 to vector<1x128xi32>
    %450 = arith.cmpi eq, %408, %449 : vector<1x128xi32>
    %451 = vector.extract_strided_slice %393 {offsets = [0, 124], sizes = [16, 1], strides = [1, 1]} : vector<16x128xf32> to vector<16x1xf32>
    %cst_121 = arith.constant 0.054488685 : f32
    %452 = vector.broadcast %cst_121 : f32 to vector<16x1xf32>
    %453 = arith.mulf %452, %451 : vector<16x1xf32>
    %454 = vector.extract_strided_slice %393 {offsets = [0, 125], sizes = [16, 1], strides = [1, 1]} : vector<16x128xf32> to vector<16x1xf32>
    %cst_122 = arith.constant 0.244201347 : f32
    %455 = vector.broadcast %cst_122 : f32 to vector<16x1xf32>
    %456 = arith.mulf %455, %454 : vector<16x1xf32>
    %457 = arith.addf %453, %456 : vector<16x1xf32>
    %458 = vector.extract_strided_slice %393 {offsets = [0, 126], sizes = [16, 1], strides = [1, 1]} : vector<16x128xf32> to vector<16x1xf32>
    %cst_123 = arith.constant 0.457108617 : f32
    %459 = vector.broadcast %cst_123 : f32 to vector<16x1xf32>
    %460 = arith.mulf %459, %458 : vector<16x1xf32>
    %461 = arith.addf %457, %460 : vector<16x1xf32>
    %462 = vector.extract_strided_slice %393 {offsets = [0, 127], sizes = [16, 1], strides = [1, 1]} : vector<16x128xf32> to vector<16x1xf32>
    %cst_124 = arith.constant 0.244201347 : f32
    %463 = vector.broadcast %cst_124 : f32 to vector<16x1xf32>
    %464 = arith.mulf %463, %462 : vector<16x1xf32>
    %465 = arith.addf %461, %464 : vector<16x1xf32>
    %466 = vector.shape_cast %450 : vector<1x128xi1> to vector<1x128xi1>
    %467 = vector.broadcast %466 : vector<1x128xi1> to vector<16x128xi1>
    %468 = vector.shape_cast %465 : vector<16x1xf32> to vector<16x1xf32>
    %469 = vector.broadcast %468 : vector<16x1xf32> to vector<16x128xf32>
    %470 = arith.select %467, %469, %448 : vector<16x128xi1>, vector<16x128xf32>
    %c127_i32_125 = arith.constant 127 : i32
    %471 = vector.broadcast %c127_i32_125 : i32 to vector<1x128xi32>
    %472 = arith.cmpi eq, %408, %471 : vector<1x128xi32>
    %473 = vector.extract_strided_slice %393 {offsets = [0, 125], sizes = [16, 1], strides = [1, 1]} : vector<16x128xf32> to vector<16x1xf32>
    %cst_126 = arith.constant 0.10897737 : f32
    %474 = vector.broadcast %cst_126 : f32 to vector<16x1xf32>
    %475 = arith.mulf %474, %473 : vector<16x1xf32>
    %476 = vector.extract_strided_slice %393 {offsets = [0, 126], sizes = [16, 1], strides = [1, 1]} : vector<16x128xf32> to vector<16x1xf32>
    %cst_127 = arith.constant 0.488402694 : f32
    %477 = vector.broadcast %cst_127 : f32 to vector<16x1xf32>
    %478 = arith.mulf %477, %476 : vector<16x1xf32>
    %479 = arith.addf %475, %478 : vector<16x1xf32>
    %480 = vector.extract_strided_slice %393 {offsets = [0, 127], sizes = [16, 1], strides = [1, 1]} : vector<16x128xf32> to vector<16x1xf32>
    %cst_128 = arith.constant 0.402619958 : f32
    %481 = vector.broadcast %cst_128 : f32 to vector<16x1xf32>
    %482 = arith.mulf %481, %480 : vector<16x1xf32>
    %483 = arith.addf %479, %482 : vector<16x1xf32>
    %484 = vector.shape_cast %472 : vector<1x128xi1> to vector<1x128xi1>
    %485 = vector.broadcast %484 : vector<1x128xi1> to vector<16x128xi1>
    %486 = vector.shape_cast %483 : vector<16x1xf32> to vector<16x1xf32>
    %487 = vector.broadcast %486 : vector<16x1xf32> to vector<16x128xf32>
    %488 = arith.select %485, %487, %470 : vector<16x128xi1>, vector<16x128xf32>
    %c2_i32_129 = arith.constant 2 : i32
    %489 = tpu.dynamic_rotate %488 by %c2_i32_129 dim 0 : vector<16x128xf32>, i32 -> vector<16x128xf32>
    %c14_i32_130 = arith.constant 14 : i32
    %490 = tpu.dynamic_rotate %488 by %c14_i32_130 dim 0 : vector<16x128xf32>, i32 -> vector<16x128xf32>
    %491 = arith.addf %489, %490 : vector<16x128xf32>
    %cst_131 = arith.constant 0.054488685 : f32
    %492 = vector.broadcast %cst_131 : f32 to vector<16x128xf32>
    %493 = arith.mulf %492, %491 : vector<16x128xf32>
    %c1_i32_132 = arith.constant 1 : i32
    %494 = tpu.dynamic_rotate %488 by %c1_i32_132 dim 0 : vector<16x128xf32>, i32 -> vector<16x128xf32>
    %c15_i32_133 = arith.constant 15 : i32
    %495 = tpu.dynamic_rotate %488 by %c15_i32_133 dim 0 : vector<16x128xf32>, i32 -> vector<16x128xf32>
    %496 = arith.addf %494, %495 : vector<16x128xf32>
    %cst_134 = arith.constant 0.244201347 : f32
    %497 = vector.broadcast %cst_134 : f32 to vector<16x128xf32>
    %498 = arith.mulf %497, %496 : vector<16x128xf32>
    %499 = arith.addf %493, %498 : vector<16x128xf32>
    %cst_135 = arith.constant 0.402619958 : f32
    %500 = vector.broadcast %cst_135 : f32 to vector<16x128xf32>
    %501 = arith.mulf %500, %488 : vector<16x128xf32>
    %502 = arith.addf %499, %501 : vector<16x128xf32>
    %503 = tpu.iota {dimensions = array<i32: 0>} : vector<16x1xi32>
    %c0_i32_136 = arith.constant 0 : i32
    %504 = vector.broadcast %c0_i32_136 : i32 to vector<16x1xi32>
    %505 = arith.cmpi eq, %503, %504 : vector<16x1xi32>
    %506 = vector.extract_strided_slice %488 {offsets = [0, 0], sizes = [1, 128], strides = [1, 1]} : vector<16x128xf32> to vector<1x128xf32>
    %cst_137 = arith.constant 0.402619958 : f32
    %507 = vector.broadcast %cst_137 : f32 to vector<1x128xf32>
    %508 = arith.mulf %507, %506 : vector<1x128xf32>
    %509 = vector.extract_strided_slice %488 {offsets = [1, 0], sizes = [1, 128], strides = [1, 1]} : vector<16x128xf32> to vector<1x128xf32>
    %cst_138 = arith.constant 0.488402694 : f32
    %510 = vector.broadcast %cst_138 : f32 to vector<1x128xf32>
    %511 = arith.mulf %510, %509 : vector<1x128xf32>
    %512 = arith.addf %508, %511 : vector<1x128xf32>
    %513 = vector.extract_strided_slice %488 {offsets = [2, 0], sizes = [1, 128], strides = [1, 1]} : vector<16x128xf32> to vector<1x128xf32>
    %cst_139 = arith.constant 0.10897737 : f32
    %514 = vector.broadcast %cst_139 : f32 to vector<1x128xf32>
    %515 = arith.mulf %514, %513 : vector<1x128xf32>
    %516 = arith.addf %512, %515 : vector<1x128xf32>
    %517 = vector.shape_cast %505 : vector<16x1xi1> to vector<16x1xi1>
    %518 = vector.broadcast %517 : vector<16x1xi1> to vector<16x128xi1>
    %519 = vector.shape_cast %516 : vector<1x128xf32> to vector<1x128xf32>
    %520 = vector.broadcast %519 : vector<1x128xf32> to vector<16x128xf32>
    %521 = arith.select %518, %520, %502 : vector<16x128xi1>, vector<16x128xf32>
    %c1_i32_140 = arith.constant 1 : i32
    %522 = vector.broadcast %c1_i32_140 : i32 to vector<16x1xi32>
    %523 = arith.cmpi eq, %503, %522 : vector<16x1xi32>
    %524 = vector.extract_strided_slice %488 {offsets = [0, 0], sizes = [1, 128], strides = [1, 1]} : vector<16x128xf32> to vector<1x128xf32>
    %cst_141 = arith.constant 0.244201347 : f32
    %525 = vector.broadcast %cst_141 : f32 to vector<1x128xf32>
    %526 = arith.mulf %525, %524 : vector<1x128xf32>
    %527 = vector.extract_strided_slice %488 {offsets = [1, 0], sizes = [1, 128], strides = [1, 1]} : vector<16x128xf32> to vector<1x128xf32>
    %cst_142 = arith.constant 0.457108617 : f32
    %528 = vector.broadcast %cst_142 : f32 to vector<1x128xf32>
    %529 = arith.mulf %528, %527 : vector<1x128xf32>
    %530 = arith.addf %526, %529 : vector<1x128xf32>
    %531 = vector.extract_strided_slice %488 {offsets = [2, 0], sizes = [1, 128], strides = [1, 1]} : vector<16x128xf32> to vector<1x128xf32>
    %cst_143 = arith.constant 0.244201347 : f32
    %532 = vector.broadcast %cst_143 : f32 to vector<1x128xf32>
    %533 = arith.mulf %532, %531 : vector<1x128xf32>
    %534 = arith.addf %530, %533 : vector<1x128xf32>
    %535 = vector.extract_strided_slice %488 {offsets = [3, 0], sizes = [1, 128], strides = [1, 1]} : vector<16x128xf32> to vector<1x128xf32>
    %cst_144 = arith.constant 0.054488685 : f32
    %536 = vector.broadcast %cst_144 : f32 to vector<1x128xf32>
    %537 = arith.mulf %536, %535 : vector<1x128xf32>
    %538 = arith.addf %534, %537 : vector<1x128xf32>
    %539 = vector.shape_cast %523 : vector<16x1xi1> to vector<16x1xi1>
    %540 = vector.broadcast %539 : vector<16x1xi1> to vector<16x128xi1>
    %541 = vector.shape_cast %538 : vector<1x128xf32> to vector<1x128xf32>
    %542 = vector.broadcast %541 : vector<1x128xf32> to vector<16x128xf32>
    %543 = arith.select %540, %542, %521 : vector<16x128xi1>, vector<16x128xf32>
    %c14_i32_145 = arith.constant 14 : i32
    %544 = vector.broadcast %c14_i32_145 : i32 to vector<16x1xi32>
    %545 = arith.cmpi eq, %503, %544 : vector<16x1xi32>
    %546 = vector.extract_strided_slice %488 {offsets = [12, 0], sizes = [1, 128], strides = [1, 1]} : vector<16x128xf32> to vector<1x128xf32>
    %cst_146 = arith.constant 0.054488685 : f32
    %547 = vector.broadcast %cst_146 : f32 to vector<1x128xf32>
    %548 = arith.mulf %547, %546 : vector<1x128xf32>
    %549 = vector.extract_strided_slice %488 {offsets = [13, 0], sizes = [1, 128], strides = [1, 1]} : vector<16x128xf32> to vector<1x128xf32>
    %cst_147 = arith.constant 0.244201347 : f32
    %550 = vector.broadcast %cst_147 : f32 to vector<1x128xf32>
    %551 = arith.mulf %550, %549 : vector<1x128xf32>
    %552 = arith.addf %548, %551 : vector<1x128xf32>
    %553 = vector.extract_strided_slice %488 {offsets = [14, 0], sizes = [1, 128], strides = [1, 1]} : vector<16x128xf32> to vector<1x128xf32>
    %cst_148 = arith.constant 0.457108617 : f32
    %554 = vector.broadcast %cst_148 : f32 to vector<1x128xf32>
    %555 = arith.mulf %554, %553 : vector<1x128xf32>
    %556 = arith.addf %552, %555 : vector<1x128xf32>
    %557 = vector.extract_strided_slice %488 {offsets = [15, 0], sizes = [1, 128], strides = [1, 1]} : vector<16x128xf32> to vector<1x128xf32>
    %cst_149 = arith.constant 0.244201347 : f32
    %558 = vector.broadcast %cst_149 : f32 to vector<1x128xf32>
    %559 = arith.mulf %558, %557 : vector<1x128xf32>
    %560 = arith.addf %556, %559 : vector<1x128xf32>
    %561 = vector.shape_cast %545 : vector<16x1xi1> to vector<16x1xi1>
    %562 = vector.broadcast %561 : vector<16x1xi1> to vector<16x128xi1>
    %563 = vector.shape_cast %560 : vector<1x128xf32> to vector<1x128xf32>
    %564 = vector.broadcast %563 : vector<1x128xf32> to vector<16x128xf32>
    %565 = arith.select %562, %564, %543 : vector<16x128xi1>, vector<16x128xf32>
    %c15_i32_150 = arith.constant 15 : i32
    %566 = vector.broadcast %c15_i32_150 : i32 to vector<16x1xi32>
    %567 = arith.cmpi eq, %503, %566 : vector<16x1xi32>
    %568 = vector.extract_strided_slice %488 {offsets = [13, 0], sizes = [1, 128], strides = [1, 1]} : vector<16x128xf32> to vector<1x128xf32>
    %cst_151 = arith.constant 0.10897737 : f32
    %569 = vector.broadcast %cst_151 : f32 to vector<1x128xf32>
    %570 = arith.mulf %569, %568 : vector<1x128xf32>
    %571 = vector.extract_strided_slice %488 {offsets = [14, 0], sizes = [1, 128], strides = [1, 1]} : vector<16x128xf32> to vector<1x128xf32>
    %cst_152 = arith.constant 0.488402694 : f32
    %572 = vector.broadcast %cst_152 : f32 to vector<1x128xf32>
    %573 = arith.mulf %572, %571 : vector<1x128xf32>
    %574 = arith.addf %570, %573 : vector<1x128xf32>
    %575 = vector.extract_strided_slice %488 {offsets = [15, 0], sizes = [1, 128], strides = [1, 1]} : vector<16x128xf32> to vector<1x128xf32>
    %cst_153 = arith.constant 0.402619958 : f32
    %576 = vector.broadcast %cst_153 : f32 to vector<1x128xf32>
    %577 = arith.mulf %576, %575 : vector<1x128xf32>
    %578 = arith.addf %574, %577 : vector<1x128xf32>
    %579 = vector.shape_cast %567 : vector<16x1xi1> to vector<16x1xi1>
    %580 = vector.broadcast %579 : vector<16x1xi1> to vector<16x128xi1>
    %581 = vector.shape_cast %578 : vector<1x128xf32> to vector<1x128xf32>
    %582 = vector.broadcast %581 : vector<1x128xf32> to vector<16x128xf32>
    %583 = arith.select %580, %582, %565 : vector<16x128xi1>, vector<16x128xf32>
    %584 = arith.subf %393, %583 : vector<16x128xf32>
    %c2_154 = arith.constant 2 : index
    %c0_155 = arith.constant 0 : index
    %c0_156 = arith.constant 0 : index
    %585 = vector.load %arg2[%c2_154, %c0_155, %c0_156] : memref<4x16x128xf32, #tpu.memory_space<vmem>>, vector<1x16x128xf32>
    %586 = vector.shape_cast %585 : vector<1x16x128xf32> to vector<16x128xf32>
    %587 = vector.shape_cast %584 : vector<16x128xf32> to vector<1x16x128xf32>
    tpu.vector_store %arg2[%c2_154, %c0_155, %c0_156], %587 {strides = array<i32>} : memref<4x16x128xf32, #tpu.memory_space<vmem>>, vector<1x16x128xf32>,
    %c3 = arith.constant 3 : index
    %c0_157 = arith.constant 0 : index
    %c0_158 = arith.constant 0 : index
    %588 = vector.load %arg1[%c3, %c0_157, %c0_158] : memref<4x16x128xf32, #tpu.memory_space<vmem>>, vector<1x16x128xf32>
    %589 = vector.shape_cast %588 : vector<1x16x128xf32> to vector<16x128xf32>
    %c2_i32_159 = arith.constant 2 : i32
    %590 = tpu.dynamic_rotate %589 by %c2_i32_159 dim 1 : vector<16x128xf32>, i32 -> vector<16x128xf32>
    %c126_i32_160 = arith.constant 126 : i32
    %591 = tpu.dynamic_rotate %589 by %c126_i32_160 dim 1 : vector<16x128xf32>, i32 -> vector<16x128xf32>
    %592 = arith.addf %590, %591 : vector<16x128xf32>
    %cst_161 = arith.constant 0.054488685 : f32
    %593 = vector.broadcast %cst_161 : f32 to vector<16x128xf32>
    %594 = arith.mulf %593, %592 : vector<16x128xf32>
    %c1_i32_162 = arith.constant 1 : i32
    %595 = tpu.dynamic_rotate %589 by %c1_i32_162 dim 1 : vector<16x128xf32>, i32 -> vector<16x128xf32>
    %c127_i32_163 = arith.constant 127 : i32
    %596 = tpu.dynamic_rotate %589 by %c127_i32_163 dim 1 : vector<16x128xf32>, i32 -> vector<16x128xf32>
    %597 = arith.addf %595, %596 : vector<16x128xf32>
    %cst_164 = arith.constant 0.244201347 : f32
    %598 = vector.broadcast %cst_164 : f32 to vector<16x128xf32>
    %599 = arith.mulf %598, %597 : vector<16x128xf32>
    %600 = arith.addf %594, %599 : vector<16x128xf32>
    %cst_165 = arith.constant 0.402619958 : f32
    %601 = vector.broadcast %cst_165 : f32 to vector<16x128xf32>
    %602 = arith.mulf %601, %589 : vector<16x128xf32>
    %603 = arith.addf %600, %602 : vector<16x128xf32>
    %604 = tpu.iota {dimensions = array<i32: 1>} : vector<1x128xi32>
    %c0_i32_166 = arith.constant 0 : i32
    %605 = vector.broadcast %c0_i32_166 : i32 to vector<1x128xi32>
    %606 = arith.cmpi eq, %604, %605 : vector<1x128xi32>
    %607 = vector.extract_strided_slice %589 {offsets = [0, 0], sizes = [16, 1], strides = [1, 1]} : vector<16x128xf32> to vector<16x1xf32>
    %cst_167 = arith.constant 0.402619958 : f32
    %608 = vector.broadcast %cst_167 : f32 to vector<16x1xf32>
    %609 = arith.mulf %608, %607 : vector<16x1xf32>
    %610 = vector.extract_strided_slice %589 {offsets = [0, 1], sizes = [16, 1], strides = [1, 1]} : vector<16x128xf32> to vector<16x1xf32>
    %cst_168 = arith.constant 0.488402694 : f32
    %611 = vector.broadcast %cst_168 : f32 to vector<16x1xf32>
    %612 = arith.mulf %611, %610 : vector<16x1xf32>
    %613 = arith.addf %609, %612 : vector<16x1xf32>
    %614 = vector.extract_strided_slice %589 {offsets = [0, 2], sizes = [16, 1], strides = [1, 1]} : vector<16x128xf32> to vector<16x1xf32>
    %cst_169 = arith.constant 0.10897737 : f32
    %615 = vector.broadcast %cst_169 : f32 to vector<16x1xf32>
    %616 = arith.mulf %615, %614 : vector<16x1xf32>
    %617 = arith.addf %613, %616 : vector<16x1xf32>
    %618 = vector.shape_cast %606 : vector<1x128xi1> to vector<1x128xi1>
    %619 = vector.broadcast %618 : vector<1x128xi1> to vector<16x128xi1>
    %620 = vector.shape_cast %617 : vector<16x1xf32> to vector<16x1xf32>
    %621 = vector.broadcast %620 : vector<16x1xf32> to vector<16x128xf32>
    %622 = arith.select %619, %621, %603 : vector<16x128xi1>, vector<16x128xf32>
    %c1_i32_170 = arith.constant 1 : i32
    %623 = vector.broadcast %c1_i32_170 : i32 to vector<1x128xi32>
    %624 = arith.cmpi eq, %604, %623 : vector<1x128xi32>
    %625 = vector.extract_strided_slice %589 {offsets = [0, 0], sizes = [16, 1], strides = [1, 1]} : vector<16x128xf32> to vector<16x1xf32>
    %cst_171 = arith.constant 0.244201347 : f32
    %626 = vector.broadcast %cst_171 : f32 to vector<16x1xf32>
    %627 = arith.mulf %626, %625 : vector<16x1xf32>
    %628 = vector.extract_strided_slice %589 {offsets = [0, 1], sizes = [16, 1], strides = [1, 1]} : vector<16x128xf32> to vector<16x1xf32>
    %cst_172 = arith.constant 0.457108617 : f32
    %629 = vector.broadcast %cst_172 : f32 to vector<16x1xf32>
    %630 = arith.mulf %629, %628 : vector<16x1xf32>
    %631 = arith.addf %627, %630 : vector<16x1xf32>
    %632 = vector.extract_strided_slice %589 {offsets = [0, 2], sizes = [16, 1], strides = [1, 1]} : vector<16x128xf32> to vector<16x1xf32>
    %cst_173 = arith.constant 0.244201347 : f32
    %633 = vector.broadcast %cst_173 : f32 to vector<16x1xf32>
    %634 = arith.mulf %633, %632 : vector<16x1xf32>
    %635 = arith.addf %631, %634 : vector<16x1xf32>
    %636 = vector.extract_strided_slice %589 {offsets = [0, 3], sizes = [16, 1], strides = [1, 1]} : vector<16x128xf32> to vector<16x1xf32>
    %cst_174 = arith.constant 0.054488685 : f32
    %637 = vector.broadcast %cst_174 : f32 to vector<16x1xf32>
    %638 = arith.mulf %637, %636 : vector<16x1xf32>
    %639 = arith.addf %635, %638 : vector<16x1xf32>
    %640 = vector.shape_cast %624 : vector<1x128xi1> to vector<1x128xi1>
    %641 = vector.broadcast %640 : vector<1x128xi1> to vector<16x128xi1>
    %642 = vector.shape_cast %639 : vector<16x1xf32> to vector<16x1xf32>
    %643 = vector.broadcast %642 : vector<16x1xf32> to vector<16x128xf32>
    %644 = arith.select %641, %643, %622 : vector<16x128xi1>, vector<16x128xf32>
    %c126_i32_175 = arith.constant 126 : i32
    %645 = vector.broadcast %c126_i32_175 : i32 to vector<1x128xi32>
    %646 = arith.cmpi eq, %604, %645 : vector<1x128xi32>
    %647 = vector.extract_strided_slice %589 {offsets = [0, 124], sizes = [16, 1], strides = [1, 1]} : vector<16x128xf32> to vector<16x1xf32>
    %cst_176 = arith.constant 0.054488685 : f32
    %648 = vector.broadcast %cst_176 : f32 to vector<16x1xf32>
    %649 = arith.mulf %648, %647 : vector<16x1xf32>
    %650 = vector.extract_strided_slice %589 {offsets = [0, 125], sizes = [16, 1], strides = [1, 1]} : vector<16x128xf32> to vector<16x1xf32>
    %cst_177 = arith.constant 0.244201347 : f32
    %651 = vector.broadcast %cst_177 : f32 to vector<16x1xf32>
    %652 = arith.mulf %651, %650 : vector<16x1xf32>
    %653 = arith.addf %649, %652 : vector<16x1xf32>
    %654 = vector.extract_strided_slice %589 {offsets = [0, 126], sizes = [16, 1], strides = [1, 1]} : vector<16x128xf32> to vector<16x1xf32>
    %cst_178 = arith.constant 0.457108617 : f32
    %655 = vector.broadcast %cst_178 : f32 to vector<16x1xf32>
    %656 = arith.mulf %655, %654 : vector<16x1xf32>
    %657 = arith.addf %653, %656 : vector<16x1xf32>
    %658 = vector.extract_strided_slice %589 {offsets = [0, 127], sizes = [16, 1], strides = [1, 1]} : vector<16x128xf32> to vector<16x1xf32>
    %cst_179 = arith.constant 0.244201347 : f32
    %659 = vector.broadcast %cst_179 : f32 to vector<16x1xf32>
    %660 = arith.mulf %659, %658 : vector<16x1xf32>
    %661 = arith.addf %657, %660 : vector<16x1xf32>
    %662 = vector.shape_cast %646 : vector<1x128xi1> to vector<1x128xi1>
    %663 = vector.broadcast %662 : vector<1x128xi1> to vector<16x128xi1>
    %664 = vector.shape_cast %661 : vector<16x1xf32> to vector<16x1xf32>
    %665 = vector.broadcast %664 : vector<16x1xf32> to vector<16x128xf32>
    %666 = arith.select %663, %665, %644 : vector<16x128xi1>, vector<16x128xf32>
    %c127_i32_180 = arith.constant 127 : i32
    %667 = vector.broadcast %c127_i32_180 : i32 to vector<1x128xi32>
    %668 = arith.cmpi eq, %604, %667 : vector<1x128xi32>
    %669 = vector.extract_strided_slice %589 {offsets = [0, 125], sizes = [16, 1], strides = [1, 1]} : vector<16x128xf32> to vector<16x1xf32>
    %cst_181 = arith.constant 0.10897737 : f32
    %670 = vector.broadcast %cst_181 : f32 to vector<16x1xf32>
    %671 = arith.mulf %670, %669 : vector<16x1xf32>
    %672 = vector.extract_strided_slice %589 {offsets = [0, 126], sizes = [16, 1], strides = [1, 1]} : vector<16x128xf32> to vector<16x1xf32>
    %cst_182 = arith.constant 0.488402694 : f32
    %673 = vector.broadcast %cst_182 : f32 to vector<16x1xf32>
    %674 = arith.mulf %673, %672 : vector<16x1xf32>
    %675 = arith.addf %671, %674 : vector<16x1xf32>
    %676 = vector.extract_strided_slice %589 {offsets = [0, 127], sizes = [16, 1], strides = [1, 1]} : vector<16x128xf32> to vector<16x1xf32>
    %cst_183 = arith.constant 0.402619958 : f32
    %677 = vector.broadcast %cst_183 : f32 to vector<16x1xf32>
    %678 = arith.mulf %677, %676 : vector<16x1xf32>
    %679 = arith.addf %675, %678 : vector<16x1xf32>
    %680 = vector.shape_cast %668 : vector<1x128xi1> to vector<1x128xi1>
    %681 = vector.broadcast %680 : vector<1x128xi1> to vector<16x128xi1>
    %682 = vector.shape_cast %679 : vector<16x1xf32> to vector<16x1xf32>
    %683 = vector.broadcast %682 : vector<16x1xf32> to vector<16x128xf32>
    %684 = arith.select %681, %683, %666 : vector<16x128xi1>, vector<16x128xf32>
    %c2_i32_184 = arith.constant 2 : i32
    %685 = tpu.dynamic_rotate %684 by %c2_i32_184 dim 0 : vector<16x128xf32>, i32 -> vector<16x128xf32>
    %c14_i32_185 = arith.constant 14 : i32
    %686 = tpu.dynamic_rotate %684 by %c14_i32_185 dim 0 : vector<16x128xf32>, i32 -> vector<16x128xf32>
    %687 = arith.addf %685, %686 : vector<16x128xf32>
    %cst_186 = arith.constant 0.054488685 : f32
    %688 = vector.broadcast %cst_186 : f32 to vector<16x128xf32>
    %689 = arith.mulf %688, %687 : vector<16x128xf32>
    %c1_i32_187 = arith.constant 1 : i32
    %690 = tpu.dynamic_rotate %684 by %c1_i32_187 dim 0 : vector<16x128xf32>, i32 -> vector<16x128xf32>
    %c15_i32_188 = arith.constant 15 : i32
    %691 = tpu.dynamic_rotate %684 by %c15_i32_188 dim 0 : vector<16x128xf32>, i32 -> vector<16x128xf32>
    %692 = arith.addf %690, %691 : vector<16x128xf32>
    %cst_189 = arith.constant 0.244201347 : f32
    %693 = vector.broadcast %cst_189 : f32 to vector<16x128xf32>
    %694 = arith.mulf %693, %692 : vector<16x128xf32>
    %695 = arith.addf %689, %694 : vector<16x128xf32>
    %cst_190 = arith.constant 0.402619958 : f32
    %696 = vector.broadcast %cst_190 : f32 to vector<16x128xf32>
    %697 = arith.mulf %696, %684 : vector<16x128xf32>
    %698 = arith.addf %695, %697 : vector<16x128xf32>
    %699 = tpu.iota {dimensions = array<i32: 0>} : vector<16x1xi32>
    %c0_i32_191 = arith.constant 0 : i32
    %700 = vector.broadcast %c0_i32_191 : i32 to vector<16x1xi32>
    %701 = arith.cmpi eq, %699, %700 : vector<16x1xi32>
    %702 = vector.extract_strided_slice %684 {offsets = [0, 0], sizes = [1, 128], strides = [1, 1]} : vector<16x128xf32> to vector<1x128xf32>
    %cst_192 = arith.constant 0.402619958 : f32
    %703 = vector.broadcast %cst_192 : f32 to vector<1x128xf32>
    %704 = arith.mulf %703, %702 : vector<1x128xf32>
    %705 = vector.extract_strided_slice %684 {offsets = [1, 0], sizes = [1, 128], strides = [1, 1]} : vector<16x128xf32> to vector<1x128xf32>
    %cst_193 = arith.constant 0.488402694 : f32
    %706 = vector.broadcast %cst_193 : f32 to vector<1x128xf32>
    %707 = arith.mulf %706, %705 : vector<1x128xf32>
    %708 = arith.addf %704, %707 : vector<1x128xf32>
    %709 = vector.extract_strided_slice %684 {offsets = [2, 0], sizes = [1, 128], strides = [1, 1]} : vector<16x128xf32> to vector<1x128xf32>
    %cst_194 = arith.constant 0.10897737 : f32
    %710 = vector.broadcast %cst_194 : f32 to vector<1x128xf32>
    %711 = arith.mulf %710, %709 : vector<1x128xf32>
    %712 = arith.addf %708, %711 : vector<1x128xf32>
    %713 = vector.shape_cast %701 : vector<16x1xi1> to vector<16x1xi1>
    %714 = vector.broadcast %713 : vector<16x1xi1> to vector<16x128xi1>
    %715 = vector.shape_cast %712 : vector<1x128xf32> to vector<1x128xf32>
    %716 = vector.broadcast %715 : vector<1x128xf32> to vector<16x128xf32>
    %717 = arith.select %714, %716, %698 : vector<16x128xi1>, vector<16x128xf32>
    %c1_i32_195 = arith.constant 1 : i32
    %718 = vector.broadcast %c1_i32_195 : i32 to vector<16x1xi32>
    %719 = arith.cmpi eq, %699, %718 : vector<16x1xi32>
    %720 = vector.extract_strided_slice %684 {offsets = [0, 0], sizes = [1, 128], strides = [1, 1]} : vector<16x128xf32> to vector<1x128xf32>
    %cst_196 = arith.constant 0.244201347 : f32
    %721 = vector.broadcast %cst_196 : f32 to vector<1x128xf32>
    %722 = arith.mulf %721, %720 : vector<1x128xf32>
    %723 = vector.extract_strided_slice %684 {offsets = [1, 0], sizes = [1, 128], strides = [1, 1]} : vector<16x128xf32> to vector<1x128xf32>
    %cst_197 = arith.constant 0.457108617 : f32
    %724 = vector.broadcast %cst_197 : f32 to vector<1x128xf32>
    %725 = arith.mulf %724, %723 : vector<1x128xf32>
    %726 = arith.addf %722, %725 : vector<1x128xf32>
    %727 = vector.extract_strided_slice %684 {offsets = [2, 0], sizes = [1, 128], strides = [1, 1]} : vector<16x128xf32> to vector<1x128xf32>
    %cst_198 = arith.constant 0.244201347 : f32
    %728 = vector.broadcast %cst_198 : f32 to vector<1x128xf32>
    %729 = arith.mulf %728, %727 : vector<1x128xf32>
    %730 = arith.addf %726, %729 : vector<1x128xf32>
    %731 = vector.extract_strided_slice %684 {offsets = [3, 0], sizes = [1, 128], strides = [1, 1]} : vector<16x128xf32> to vector<1x128xf32>
    %cst_199 = arith.constant 0.054488685 : f32
    %732 = vector.broadcast %cst_199 : f32 to vector<1x128xf32>
    %733 = arith.mulf %732, %731 : vector<1x128xf32>
    %734 = arith.addf %730, %733 : vector<1x128xf32>
    %735 = vector.shape_cast %719 : vector<16x1xi1> to vector<16x1xi1>
    %736 = vector.broadcast %735 : vector<16x1xi1> to vector<16x128xi1>
    %737 = vector.shape_cast %734 : vector<1x128xf32> to vector<1x128xf32>
    %738 = vector.broadcast %737 : vector<1x128xf32> to vector<16x128xf32>
    %739 = arith.select %736, %738, %717 : vector<16x128xi1>, vector<16x128xf32>
    %c14_i32_200 = arith.constant 14 : i32
    %740 = vector.broadcast %c14_i32_200 : i32 to vector<16x1xi32>
    %741 = arith.cmpi eq, %699, %740 : vector<16x1xi32>
    %742 = vector.extract_strided_slice %684 {offsets = [12, 0], sizes = [1, 128], strides = [1, 1]} : vector<16x128xf32> to vector<1x128xf32>
    %cst_201 = arith.constant 0.054488685 : f32
    %743 = vector.broadcast %cst_201 : f32 to vector<1x128xf32>
    %744 = arith.mulf %743, %742 : vector<1x128xf32>
    %745 = vector.extract_strided_slice %684 {offsets = [13, 0], sizes = [1, 128], strides = [1, 1]} : vector<16x128xf32> to vector<1x128xf32>
    %cst_202 = arith.constant 0.244201347 : f32
    %746 = vector.broadcast %cst_202 : f32 to vector<1x128xf32>
    %747 = arith.mulf %746, %745 : vector<1x128xf32>
    %748 = arith.addf %744, %747 : vector<1x128xf32>
    %749 = vector.extract_strided_slice %684 {offsets = [14, 0], sizes = [1, 128], strides = [1, 1]} : vector<16x128xf32> to vector<1x128xf32>
    %cst_203 = arith.constant 0.457108617 : f32
    %750 = vector.broadcast %cst_203 : f32 to vector<1x128xf32>
    %751 = arith.mulf %750, %749 : vector<1x128xf32>
    %752 = arith.addf %748, %751 : vector<1x128xf32>
    %753 = vector.extract_strided_slice %684 {offsets = [15, 0], sizes = [1, 128], strides = [1, 1]} : vector<16x128xf32> to vector<1x128xf32>
    %cst_204 = arith.constant 0.244201347 : f32
    %754 = vector.broadcast %cst_204 : f32 to vector<1x128xf32>
    %755 = arith.mulf %754, %753 : vector<1x128xf32>
    %756 = arith.addf %752, %755 : vector<1x128xf32>
    %757 = vector.shape_cast %741 : vector<16x1xi1> to vector<16x1xi1>
    %758 = vector.broadcast %757 : vector<16x1xi1> to vector<16x128xi1>
    %759 = vector.shape_cast %756 : vector<1x128xf32> to vector<1x128xf32>
    %760 = vector.broadcast %759 : vector<1x128xf32> to vector<16x128xf32>
    %761 = arith.select %758, %760, %739 : vector<16x128xi1>, vector<16x128xf32>
    %c15_i32_205 = arith.constant 15 : i32
    %762 = vector.broadcast %c15_i32_205 : i32 to vector<16x1xi32>
    %763 = arith.cmpi eq, %699, %762 : vector<16x1xi32>
    %764 = vector.extract_strided_slice %684 {offsets = [13, 0], sizes = [1, 128], strides = [1, 1]} : vector<16x128xf32> to vector<1x128xf32>
    %cst_206 = arith.constant 0.10897737 : f32
    %765 = vector.broadcast %cst_206 : f32 to vector<1x128xf32>
    %766 = arith.mulf %765, %764 : vector<1x128xf32>
    %767 = vector.extract_strided_slice %684 {offsets = [14, 0], sizes = [1, 128], strides = [1, 1]} : vector<16x128xf32> to vector<1x128xf32>
    %cst_207 = arith.constant 0.488402694 : f32
    %768 = vector.broadcast %cst_207 : f32 to vector<1x128xf32>
    %769 = arith.mulf %768, %767 : vector<1x128xf32>
    %770 = arith.addf %766, %769 : vector<1x128xf32>
    %771 = vector.extract_strided_slice %684 {offsets = [15, 0], sizes = [1, 128], strides = [1, 1]} : vector<16x128xf32> to vector<1x128xf32>
    %cst_208 = arith.constant 0.402619958 : f32
    %772 = vector.broadcast %cst_208 : f32 to vector<1x128xf32>
    %773 = arith.mulf %772, %771 : vector<1x128xf32>
    %774 = arith.addf %770, %773 : vector<1x128xf32>
    %775 = vector.shape_cast %763 : vector<16x1xi1> to vector<16x1xi1>
    %776 = vector.broadcast %775 : vector<16x1xi1> to vector<16x128xi1>
    %777 = vector.shape_cast %774 : vector<1x128xf32> to vector<1x128xf32>
    %778 = vector.broadcast %777 : vector<1x128xf32> to vector<16x128xf32>
    %779 = arith.select %776, %778, %761 : vector<16x128xi1>, vector<16x128xf32>
    %780 = arith.subf %589, %779 : vector<16x128xf32>
    %c3_209 = arith.constant 3 : index
    %c0_210 = arith.constant 0 : index
    %c0_211 = arith.constant 0 : index
    %781 = vector.load %arg2[%c3_209, %c0_210, %c0_211] : memref<4x16x128xf32, #tpu.memory_space<vmem>>, vector<1x16x128xf32>
    %782 = vector.shape_cast %781 : vector<1x16x128xf32> to vector<16x128xf32>
    %783 = vector.shape_cast %780 : vector<16x128xf32> to vector<1x16x128xf32>
    tpu.vector_store %arg2[%c3_209, %c0_210, %c0_211], %783 {strides = array<i32>} : memref<4x16x128xf32, #tpu.memory_space<vmem>>, vector<1x16x128xf32>,
    return
  }
  func.func @transform_0(%arg0: i32) -> (i32, i32, i32) {
    %c0_i32 = arith.constant 0 : i32
    %c0_i32_0 = arith.constant 0 : i32
    %c0_i32_1 = arith.constant 0 : i32
    return %arg0, %c0_i32, %c0_i32_0 : i32, i32, i32
  }
  func.func @transform_1(%arg0: i32) -> (i32, i32, i32) {
    %c0_i32 = arith.constant 0 : i32
    %c0_i32_0 = arith.constant 0 : i32
    %c0_i32_1 = arith.constant 0 : i32
    return %arg0, %c0_i32, %c0_i32_0 : i32, i32, i32
  }
}

</mosaic_0001>

<llo_original>
// kernel: tpu_custom_call.1
$region0: #{tpu_custom_call.1}
  #allocation0 [shape = 'u32[]', space=smem, size = 0x4, offset = 0x4, fixed_abs, tag = 'smem constant byte address 0x4 - core index']
  #allocation1 [shape = 'u32[144,128]{1,0:T(1,128)}', space=vmem, size = 0x12000, scoped, tag = 'internal scratch']
  %s0 = inlined_call_operand.hbm [shape: f32[8,16,128], index: 0, kind: input, shape index: {}]
  %s1 = inlined_call_operand.hbm [shape: f32[8,16,128], index: 1, kind: output, shape index: {}]
  %s2 = sld [smem:[#allocation0]]
  $region41: #{tpu_custom_call.1} parent=0
    _
  %s4 = ssub.s32 1, %s2
  %s5 = scalar_select 0, %s4, %s2
  $region1: #{tpu_custom_call.1} parent=0
    #allocation2 [shape = 'u8[65536]{0}', space=vmem, size = 0x10000, scoped, tag = 'input window, operand 0']
    #allocation3 [shape = 's32[2]{0}', space=sflag, size = 0x8, scoped, tag = 'scoped memory for tpu_custom_call.1']
    #allocation4 [shape = 's32[2]{0}', space=sflag, size = 0x8, scoped, tag = 'scoped memory for tpu_custom_call.1']
    #allocation5 [shape = 'u8[65536]{0}', space=vmem, size = 0x10000, scoped, tag = 'output window, operand 0']
    %6 = vsyncpa [#allocation3], 0
    %s7 = scalar_lea.sflag [#allocation3], 1
    %8 = vsyncpa %s7, 0
    %9 = vsyncpa [#allocation4], 0
    %s10 = scalar_lea.sflag [#allocation4], 1
    %11 = vsyncpa %s10, 0
    loop: start=0, step=1, limit=4
    $region2: #{tpu_custom_call.1} parent=1 // loop_pre_header
      _
    $region3: #{tpu_custom_call.1} parent=1 // loop_header
      %s13 = sphi 0, %s17
      %p14 = scmp.ge.s32.totalorder %s13, 4
      %s23 = sphi 0, %s25
      %s26 = sphi 0, %s23
      %s27 = sphi 0, %s26
      %s43 = sphi 0, %s27
      %s49 = sphi 0, %s51
      %s52 = sphi 0, %s49
      %s53 = sphi 0, %s52
      %s69 = sphi 0, %s53
    $region4: #{tpu_custom_call.1} parent=1 // loop_header_branch
      %16 = sbr.rel (%p14) target = $region8
    $region5: #{tpu_custom_call.1} parent=1 // loop_body
      %s18 = ssub.s32 %s13, 1
      %s19 = ssub.s32 %s13, 2
      %s20 = sadd.s32 %s13, 1
      %s21 = ssub.s32 %s13, %s20
      %p22 = scmp.eq.s32.totalorder %s21, 0
      %s24 = sadd.s32 %s23, 1
      %s25 = scalar_select %p22, %s23, %s24
      %p28 = pneg %p22
      %p29 = scmp.eq.s32.totalorder %s13, 1
      %p30 = por %p28, %p29
      %p31 = scmp.ne.s32.totalorder %s23, %s26
      %p32 = scmp.eq.s32.totalorder %s13, 0
      %p33 = por %p31, %p32
      %p34 = scmp.ne.s32.totalorder %s23, %s26
      %p35 = scmp.eq.s32.totalorder %s18, 1
      %p36 = por %p34, %p35
      %p37 = scmp.ne.s32.totalorder %s26, %s27
      %p38 = scmp.eq.s32.totalorder %s18, 0
      %p39 = por %p37, %p38
      %p40 = scmp.ne.s32.totalorder %s26, %s27
      %p41 = scmp.eq.s32.totalorder %s19, 1
      %p42 = por %p40, %p41
      %p44 = scmp.ne.s32.totalorder %s27, %s43
      %p45 = scmp.eq.s32.totalorder %s19, 0
      %p46 = por %p44, %p45
      %s47 = ssub.s32 %s13, %s20
      %p48 = scmp.eq.s32.totalorder %s47, 0
      %s50 = sadd.s32 %s49, 1
      %s51 = scalar_select %p48, %s49, %s50
      %p54 = pneg %p48
      %p55 = scmp.eq.s32.totalorder %s13, 1
      %p56 = por %p54, %p55
      %p57 = scmp.ne.s32.totalorder %s49, %s52
      %p58 = scmp.eq.s32.totalorder %s13, 0
      %p59 = por %p57, %p58
      %p60 = scmp.ne.s32.totalorder %s49, %s52
      %p61 = scmp.eq.s32.totalorder %s18, 1
      %p62 = por %p60, %p61
      %p63 = scmp.ne.s32.totalorder %s52, %s53
      %p64 = scmp.eq.s32.totalorder %s18, 0
      %p65 = por %p63, %p64
      %p66 = scmp.ne.s32.totalorder %s52, %s53
      %p67 = scmp.eq.s32.totalorder %s19, 1
      %p68 = por %p66, %p67
      %p70 = scmp.ne.s32.totalorder %s53, %s69
      %p71 = scmp.eq.s32.totalorder %s19, 0
      %p72 = por %p70, %p71
      %p73 = scmp.le.s32.totalorder 1, %s13
      %p74 = scmp.lt.s32.totalorder %s13, 3
      %p75 = pnand %p73, %p74
      %p76 = pneg %p75
      // Predicated region
      $region9: #{tpu_custom_call.1} parent=5 // pred_check
        _
      $region10: #{tpu_custom_call.1} parent=5 // pred_check_branch
        %78 = sbr.rel (%p75) target = $region12
      $region11: #{tpu_custom_call.1} parent=5 // pred_region
        %s79 = ssub.s32 %s13, 1
      $region12: #{tpu_custom_call.1} parent=5 // pred_fallthru
        _
      %p80 = scmp.lt.s32.totalorder %s13, 2
      // Predicated region
      $region13: #{tpu_custom_call.1} parent=5 // pred_check
        %p81 = pneg %p80
      $region14: #{tpu_custom_call.1} parent=5 // pred_check_branch
        %83 = sbr.rel (%p81) target = $region16
      $region15: #{tpu_custom_call.1} parent=5 // pred_region
        // Predicated region
        $region17: #{tpu_custom_call.1} parent=15 // pred_check
          %p84 = pneg %p33
        $region18: #{tpu_custom_call.1} parent=15 // pred_check_branch
          %86 = sbr.rel (%p84) target = $region20
        $region19: #{tpu_custom_call.1} parent=15 // pred_region
          %s87 = sand.u32 %s23, 1
          %s88 = scalar_lea.sflag [#allocation3], %s87
          %s89 = sand.u32 %s23, 1
          %s90 = smul.addr %s89, 64
          %s91 = scalar_lea.vmem [#allocation2], %s90
          %s92 = smul.u32 4, %s13
          %s94 = ssub.s32 1024, 1024
          %95 = vsyncadd %s88, %s94
          %s96 = smul.addr %s92, 2
          %s97 = smul.addr %s96, 128
          %s98 = scalar_lea.hbm %s0, %s97
          %s99 = sshll.u32 %s91, 4
          %s100 = int_to_ptr.vmem [resolvable:$true] %s99
          %105 = dma.hbm_to_vmem [thread:$0]  %s98, 1024, %s100, %s88, 128, 128, 8
        $region20: #{tpu_custom_call.1} parent=15 // pred_fallthru
          _
      $region16: #{tpu_custom_call.1} parent=5 // pred_fallthru
        _
      %p106 = scmp.le.s32.totalorder 1, %s13
      %p107 = scmp.lt.s32.totalorder %s13, 3
      %p108 = pnand %p106, %p107
      %p109 = pneg %p108
      // Predicated region
      $region21: #{tpu_custom_call.1} parent=5 // pred_check
        _
      $region22: #{tpu_custom_call.1} parent=5 // pred_check_branch
        %111 = sbr.rel (%p108) target = $region24
      $region23: #{tpu_custom_call.1} parent=5 // pred_region
        %s112 = ssub.s32 %s13, 1
        %s113 = sand.u32 %s26, 1
        %s114 = scalar_lea.sflag [#allocation3], %s113
        %s115 = sand.u32 %s26, 1
        %s116 = smul.addr %s115, 64
        %s117 = scalar_lea.vmem [#allocation2], %s116
        // Predicated region
        $region25: #{tpu_custom_call.1} parent=23 // pred_check
          %p118 = pneg %p39
        $region26: #{tpu_custom_call.1} parent=23 // pred_check_branch
          %120 = sbr.rel (%p118) target = $region28
        $region27: #{tpu_custom_call.1} parent=23 // pred_region
          %121 = dma.done %s114, 1024
        $region28: #{tpu_custom_call.1} parent=23 // pred_fallthru
          _
        %s122 = sand.u32 %s26, 1
        %s123 = scalar_lea.sflag [#allocation3], %s122
        %s124 = sand.u32 %s26, 1
        %s125 = smul.addr %s124, 64
        %s126 = scalar_lea.vmem [#allocation2], %s125
        %p127 = pneg %p39
        %p128 = pneg %p36
        %p129 = pneg %p65
        %p130 = pneg %p62
        %s131 = sand.u32 %s52, 1
        %s132 = scalar_lea.sflag [#allocation4], %s131
        %s133 = sand.u32 %s52, 1
        %s134 = smul.addr %s133, 64
        %s135 = scalar_lea.vmem [#allocation5], %s134
        %s136 = smul.u32 4, %s18
        %s137 = smul.u32 4, %s18
        %v138 = vld [vmem:[%s117] sm:$0xff]
        %v139 = vld [vmem:[%s117 + $0x8] sm:$0xff]
        %140 = vrot.lane.b32.xlu0 %v138, 2
        %v141 = vpop.permute.xlu0 %140
        %142 = vrot.lane.b32.xlu0 %v139, 2
        %v143 = vpop.permute.xlu0 %142
        %144 = vrot.lane.b32.xlu0 %v138, 126
        %v145 = vpop.permute.xlu0 %144
        %146 = vrot.lane.b32.xlu0 %v139, 126
        %v147 = vpop.permute.xlu0 %146
        %v148 = vadd.f32 %v141, %v145
        %v149 = vadd.f32 %v143, %v147
        %v150 = vmul.f32 %v148, 0.054488685
        %v151 = vmul.f32 %v149, 0.054488685
        %152 = vrot.lane.b32.xlu0 %v138, 1
        %v153 = vpop.permute.xlu0 %152
        %154 = vrot.lane.b32.xlu0 %v139, 1
        %v155 = vpop.permute.xlu0 %154
        %156 = vrot.lane.b32.xlu0 %v138, 127
        %v157 = vpop.permute.xlu0 %156
        %158 = vrot.lane.b32.xlu0 %v139, 127
        %v159 = vpop.permute.xlu0 %158
        %v160 = vadd.f32 %v153, %v157
        %v161 = vadd.f32 %v155, %v159
        %v162 = vmul.f32 %v160, 0.24420135
        %v163 = vmul.f32 %v161, 0.24420135
        %v164 = vadd.f32 %v150, %v162
        %v165 = vadd.f32 %v151, %v163
        %v166 = vmul.f32 %v138, 0.40261996
        %v167 = vmul.f32 %v139, 0.40261996
        %v168 = vadd.f32 %v164, %v166
        %v169 = vadd.f32 %v165, %v167
        %v170 = vlaneseq
        %v171 = vand.u32 %v170, 127
        %vm172 = vcmp.eq.s32.totalorder %v171, 0
        %v173 = vmul.f32 %v138, 0.4884027
        %v174 = vmul.f32 %v139, 0.4884027
        %177 = vrot.lane.b32.xlu0 %v173, 127
        %v178 = vpop.permute.xlu0 %177
        %179 = vrot.lane.b32.xlu0 %v174, 127
        %v180 = vpop.permute.xlu0 %179
        %v183 = vadd.f32 %v166, %v178
        %v184 = vadd.f32 %v167, %v180
        %v185 = vmul.f32 %v138, 0.10897737
        %v186 = vmul.f32 %v139, 0.10897737
        %189 = vrot.lane.b32.xlu0 %v185, 126
        %v190 = vpop.permute.xlu0 %189
        %191 = vrot.lane.b32.xlu0 %v186, 126
        %v192 = vpop.permute.xlu0 %191
        %v195 = vadd.f32 %v183, %v190
        %v196 = vadd.f32 %v184, %v192
        %v197 = vsel %vm172, 1, 0
        %vm198 = vcmp.eq.s32.totalorder %v197, 1
        %200 = vset.pattern.permute.xlu0 0
        %201 = vperm.xlu0 %200, %v195
        %v202 = vpop.permute.xlu0 %201
        %205 = vset.pattern.permute.xlu0 0
        %206 = vperm.xlu0 %205, %v196
        %v207 = vpop.permute.xlu0 %206
        %v209 = vsel %vm198, %v202, %v168
        %v210 = vsel %vm198, %v207, %v169
        %vm211 = vcmp.eq.s32.totalorder %v171, 1
        %v212 = vmul.f32 %v138, 0.24420135
        %v213 = vmul.f32 %v139, 0.24420135
        %v214 = vmul.f32 %v138, 0.45710862
        %v215 = vmul.f32 %v139, 0.45710862
        %218 = vrot.lane.b32.xlu0 %v214, 127
        %v219 = vpop.permute.xlu0 %218
        %220 = vrot.lane.b32.xlu0 %v215, 127
        %v221 = vpop.permute.xlu0 %220
        %v224 = vadd.f32 %v212, %v219
        %v225 = vadd.f32 %v213, %v221
        %228 = vrot.lane.b32.xlu0 %v212, 126
        %v229 = vpop.permute.xlu0 %228
        %230 = vrot.lane.b32.xlu0 %v213, 126
        %v231 = vpop.permute.xlu0 %230
        %v234 = vadd.f32 %v224, %v229
        %v235 = vadd.f32 %v225, %v231
        %v236 = vmul.f32 %v138, 0.054488685
        %v237 = vmul.f32 %v139, 0.054488685
        %240 = vrot.lane.b32.xlu0 %v236, 125
        %v241 = vpop.permute.xlu0 %240
        %242 = vrot.lane.b32.xlu0 %v237, 125
        %v243 = vpop.permute.xlu0 %242
        %v246 = vadd.f32 %v234, %v241
        %v247 = vadd.f32 %v235, %v243
        %v248 = vsel %vm211, 1, 0
        %vm249 = vcmp.eq.s32.totalorder %v248, 1
        %251 = vset.pattern.permute.xlu0 0
        %252 = vperm.xlu0 %251, %v246
        %v253 = vpop.permute.xlu0 %252
        %256 = vset.pattern.permute.xlu0 0
        %257 = vperm.xlu0 %256, %v247
        %v258 = vpop.permute.xlu0 %257
        %v260 = vsel %vm249, %v253, %v209
        %v261 = vsel %vm249, %v258, %v210
        %vm262 = vcmp.eq.s32.totalorder %v171, 126
        %263 = vrot.lane.b32.xlu0 %v212, 127
        %v264 = vpop.permute.xlu0 %263
        %265 = vrot.lane.b32.xlu0 %v213, 127
        %v266 = vpop.permute.xlu0 %265
        %v269 = vadd.f32 %v236, %v264
        %v270 = vadd.f32 %v237, %v266
        %271 = vrot.lane.b32.xlu0 %v214, 126
        %v272 = vpop.permute.xlu0 %271
        %273 = vrot.lane.b32.xlu0 %v215, 126
        %v274 = vpop.permute.xlu0 %273
        %v277 = vadd.f32 %v269, %v272
        %v278 = vadd.f32 %v270, %v274
        %279 = vrot.lane.b32.xlu0 %v212, 125
        %v280 = vpop.permute.xlu0 %279
        %281 = vrot.lane.b32.xlu0 %v213, 125
        %v282 = vpop.permute.xlu0 %281
        %v285 = vadd.f32 %v277, %v280
        %v286 = vadd.f32 %v278, %v282
        %v287 = vsel %vm262, 1, 0
        %vm288 = vcmp.eq.s32.totalorder %v287, 1
        %290 = vset.pattern.permute.xlu0 124
        %291 = vperm.xlu0 %290, %v285
        %v292 = vpop.permute.xlu0 %291
        %295 = vset.pattern.permute.xlu0 124
        %296 = vperm.xlu0 %295, %v286
        %v297 = vpop.permute.xlu0 %296
        %v299 = vsel %vm288, %v292, %v260
        %v300 = vsel %vm288, %v297, %v261
        %vm301 = vcmp.eq.s32.totalorder %v171, 127
        %v302 = vadd.f32 %v185, %v178
        %v303 = vadd.f32 %v186, %v180
        %306 = vrot.lane.b32.xlu0 %v166, 126
        %v307 = vpop.permute.xlu0 %306
        %308 = vrot.lane.b32.xlu0 %v167, 126
        %v309 = vpop.permute.xlu0 %308
        %v312 = vadd.f32 %v302, %v307
        %v313 = vadd.f32 %v303, %v309
        %v314 = vsel %vm301, 1, 0
        %vm315 = vcmp.eq.s32.totalorder %v314, 1
        %317 = vset.pattern.permute.xlu0 125
        %318 = vperm.xlu0 %317, %v312
        %v319 = vpop.permute.xlu0 %318
        %322 = vset.pattern.permute.xlu0 125
        %323 = vperm.xlu0 %322, %v313
        %v324 = vpop.permute.xlu0 %323
        %v326 = vsel %vm315, %v319, %v299
        %v327 = vsel %vm315, %v324, %v300
        %v328 = vrot.slane %v326, 6
        %v329 = vrot.slane %v327, 6
        %v330 = vlaneseq
        %v331 = vshrl.u32 %v330, 7
        %vm332 = vcmp.lt.s32.totalorder %v331, 2
        %v333 = vsel %vm332, %v328, %v329
        %v334 = vsel %vm332, %v329, %v328
        %v335 = vrot.slane %v326, 2
        %v336 = vrot.slane %v327, 2
        %vm337 = vcmp.lt.s32.totalorder %v331, 6
        %v338 = vsel %vm337, %v335, %v336
        %v339 = vsel %vm337, %v336, %v335
        %v340 = vadd.f32 %v334, %v338
        %v341 = vadd.f32 %v333, %v339
        %v342 = vmul.f32 %v340, 0.054488685
        %v343 = vmul.f32 %v341, 0.054488685
        %v344 = vrot.slane %v326, 7
        %v345 = vrot.slane %v327, 7
        %vm346 = vcmp.lt.s32.totalorder %v331, 1
        %v347 = vsel %vm346, %v344, %v345
        %v348 = vsel %vm346, %v345, %v344
        %v349 = vrot.slane %v326, 1
        %v350 = vrot.slane %v327, 1
        %vm351 = vcmp.lt.s32.totalorder %v331, 7
        %v352 = vsel %vm351, %v349, %v350
        %v353 = vsel %vm351, %v350, %v349
        %v354 = vadd.f32 %v348, %v352
        %v355 = vadd.f32 %v347, %v353
        %v356 = vmul.f32 %v354, 0.24420135
        %v357 = vmul.f32 %v355, 0.24420135
        %v358 = vadd.f32 %v342, %v356
        %v359 = vadd.f32 %v343, %v357
        %v360 = vmul.f32 %v326, 0.40261996
        %v361 = vmul.f32 %v327, 0.40261996
        %v362 = vadd.f32 %v358, %v360
        %v363 = vadd.f32 %v359, %v361
        %v364 = vadd.s32 %v331, 8
        %vm365 = vcmp.eq.s32.totalorder %v331, 0
        %vm366 = vcmp.eq.s32.totalorder %v364, 0
        %v367 = vmul.f32 %v326, 0.4884027
        %v369 = vrot.slane %v367, 1
        %v371 = vadd.f32 %v360, %v369
        %v372 = vmul.f32 %v326, 0.10897737
        %v374 = vrot.slane %v372, 2
        %v376 = vadd.f32 %v371, %v374
        %v377 = vsel %vm365, 1, 0
        %v378 = vsel %vm366, 1, 0
        %vm379 = vcmp.eq.s32.totalorder %v377, 1
        %vm380 = vcmp.eq.s32.totalorder %v378, 1
        %v381 = vlaneseq
        %v382 = vshrl.u32 %v381, 7
        %v383 = vsub.s32 0, %v382
        %v384 = vrot.slane %v376, %v383
        %v385 = vsel %vm379, %v384, %v362
        %v386 = vsel %vm380, %v384, %v363
        %vm387 = vcmp.eq.s32.totalorder %v331, 1
        %vm388 = vcmp.eq.s32.totalorder %v364, 1
        %v389 = vmul.f32 %v326, 0.24420135
        %v390 = vmul.f32 %v326, 0.45710862
        %v392 = vrot.slane %v390, 1
        %v394 = vadd.f32 %v389, %v392
        %v396 = vrot.slane %v389, 2
        %v398 = vadd.f32 %v394, %v396
        %v399 = vmul.f32 %v326, 0.054488685
        %v401 = vrot.slane %v399, 3
        %v403 = vadd.f32 %v398, %v401
        %v404 = vsel %vm387, 1, 0
        %v405 = vsel %vm388, 1, 0
        %vm406 = vcmp.eq.s32.totalorder %v404, 1
        %vm407 = vcmp.eq.s32.totalorder %v405, 1
        %v408 = vlaneseq
        %v409 = vshrl.u32 %v408, 7
        %v410 = vsub.s32 0, %v409
        %v411 = vrot.slane %v403, %v410
        %v412 = vsel %vm406, %v411, %v385
        %v413 = vsel %vm407, %v411, %v386
        %vm414 = vcmp.eq.s32.totalorder %v331, 14
        %vm415 = vcmp.eq.s32.totalorder %v364, 14
        %v416 = vmul.f32 %v327, 0.054488685
        %v417 = vmul.f32 %v327, 0.24420135
        %v419 = vrot.slane %v417, 1
        %v421 = vadd.f32 %v416, %v419
        %v422 = vmul.f32 %v327, 0.45710862
        %v424 = vrot.slane %v422, 2
        %v426 = vadd.f32 %v421, %v424
        %v427 = vrot.slane %v417, 3
        %v429 = vadd.f32 %v426, %v427
        %v430 = vsel %vm414, 1, 0
        %v431 = vsel %vm415, 1, 0
        %vm432 = vcmp.eq.s32.totalorder %v430, 1
        %vm433 = vcmp.eq.s32.totalorder %v431, 1
        %v434 = vlaneseq
        %v435 = vshrl.u32 %v434, 7
        %v436 = vsub.s32 4, %v435
        %v437 = vrot.slane %v429, %v436
        %v438 = vsel %vm432, %v437, %v412
        %v439 = vsel %vm433, %v437, %v413
        %vm440 = vcmp.eq.s32.totalorder %v331, 15
        %vm441 = vcmp.eq.s32.totalorder %v364, 15
        %v442 = vmul.f32 %v327, 0.10897737
        %v443 = vmul.f32 %v327, 0.4884027
        %v445 = vrot.slane %v443, 1
        %v447 = vadd.f32 %v442, %v445
        %v449 = vrot.slane %v361, 2
        %v451 = vadd.f32 %v447, %v449
        %v452 = vsel %vm440, 1, 0
        %v453 = vsel %vm441, 1, 0
        %vm454 = vcmp.eq.s32.totalorder %v452, 1
        %vm455 = vcmp.eq.s32.totalorder %v453, 1
        %v456 = vlaneseq
        %v457 = vshrl.u32 %v456, 7
        %v458 = vsub.s32 5, %v457
        %v459 = vrot.slane %v451, %v458
        %v460 = vsel %vm454, %v459, %v438
        %v461 = vsel %vm455, %v459, %v439
        %v462 = vsub.f32 %v138, %v460
        %v463 = vsub.f32 %v139, %v461
        %464 = vst [vmem:[%s135] sm:$0xff] %v462
        %465 = vst [vmem:[%s135 + $0x8] sm:$0xff] %v463
        %s466 = scalar_lea.vmem %s117, 16 [#allocation2]
        %v467 = vld [vmem:[%s466] sm:$0xff]
        %v468 = vld [vmem:[%s466 + $0x8] sm:$0xff]
        %469 = vrot.lane.b32.xlu0 %v467, 2
        %v470 = vpop.permute.xlu0 %469
        %471 = vrot.lane.b32.xlu0 %v468, 2
        %v472 = vpop.permute.xlu0 %471
        %473 = vrot.lane.b32.xlu0 %v467, 126
        %v474 = vpop.permute.xlu0 %473
        %475 = vrot.lane.b32.xlu0 %v468, 126
        %v476 = vpop.permute.xlu0 %475
        %v477 = vadd.f32 %v470, %v474
        %v478 = vadd.f32 %v472, %v476
        %v479 = vmul.f32 %v477, 0.054488685
        %v480 = vmul.f32 %v478, 0.054488685
        %481 = vrot.lane.b32.xlu0 %v467, 1
        %v482 = vpop.permute.xlu0 %481
        %483 = vrot.lane.b32.xlu0 %v468, 1
        %v484 = vpop.permute.xlu0 %483
        %485 = vrot.lane.b32.xlu0 %v467, 127
        %v486 = vpop.permute.xlu0 %485
        %487 = vrot.lane.b32.xlu0 %v468, 127
        %v488 = vpop.permute.xlu0 %487
        %v489 = vadd.f32 %v482, %v486
        %v490 = vadd.f32 %v484, %v488
        %v491 = vmul.f32 %v489, 0.24420135
        %v492 = vmul.f32 %v490, 0.24420135
        %v493 = vadd.f32 %v479, %v491
        %v494 = vadd.f32 %v480, %v492
        %v495 = vmul.f32 %v467, 0.40261996
        %v496 = vmul.f32 %v468, 0.40261996
        %v497 = vadd.f32 %v493, %v495
        %v498 = vadd.f32 %v494, %v496
        %v499 = vmul.f32 %v467, 0.4884027
        %v500 = vmul.f32 %v468, 0.4884027
        %503 = vrot.lane.b32.xlu0 %v499, 127
        %v504 = vpop.permute.xlu0 %503
        %505 = vrot.lane.b32.xlu0 %v500, 127
        %v506 = vpop.permute.xlu0 %505
        %v509 = vadd.f32 %v495, %v504
        %v510 = vadd.f32 %v496, %v506
        %v511 = vmul.f32 %v467, 0.10897737
        %v512 = vmul.f32 %v468, 0.10897737
        %515 = vrot.lane.b32.xlu0 %v511, 126
        %v516 = vpop.permute.xlu0 %515
        %517 = vrot.lane.b32.xlu0 %v512, 126
        %v518 = vpop.permute.xlu0 %517
        %v521 = vadd.f32 %v509, %v516
        %v522 = vadd.f32 %v510, %v518
        %524 = vset.pattern.permute.xlu0 0
        %525 = vperm.xlu0 %524, %v521
        %v526 = vpop.permute.xlu0 %525
        %529 = vset.pattern.permute.xlu0 0
        %530 = vperm.xlu0 %529, %v522
        %v531 = vpop.permute.xlu0 %530
        %v533 = vsel %vm198, %v526, %v497
        %v534 = vsel %vm198, %v531, %v498
        %v535 = vmul.f32 %v467, 0.24420135
        %v536 = vmul.f32 %v468, 0.24420135
        %v537 = vmul.f32 %v467, 0.45710862
        %v538 = vmul.f32 %v468, 0.45710862
        %541 = vrot.lane.b32.xlu0 %v537, 127
        %v542 = vpop.permute.xlu0 %541
        %543 = vrot.lane.b32.xlu0 %v538, 127
        %v544 = vpop.permute.xlu0 %543
        %v547 = vadd.f32 %v535, %v542
        %v548 = vadd.f32 %v536, %v544
        %551 = vrot.lane.b32.xlu0 %v535, 126
        %v552 = vpop.permute.xlu0 %551
        %553 = vrot.lane.b32.xlu0 %v536, 126
        %v554 = vpop.permute.xlu0 %553
        %v557 = vadd.f32 %v547, %v552
        %v558 = vadd.f32 %v548, %v554
        %v559 = vmul.f32 %v467, 0.054488685
        %v560 = vmul.f32 %v468, 0.054488685
        %563 = vrot.lane.b32.xlu0 %v559, 125
        %v564 = vpop.permute.xlu0 %563
        %565 = vrot.lane.b32.xlu0 %v560, 125
        %v566 = vpop.permute.xlu0 %565
        %v569 = vadd.f32 %v557, %v564
        %v570 = vadd.f32 %v558, %v566
        %572 = vset.pattern.permute.xlu0 0
        %573 = vperm.xlu0 %572, %v569
        %v574 = vpop.permute.xlu0 %573
        %577 = vset.pattern.permute.xlu0 0
        %578 = vperm.xlu0 %577, %v570
        %v579 = vpop.permute.xlu0 %578
        %v581 = vsel %vm249, %v574, %v533
        %v582 = vsel %vm249, %v579, %v534
        %583 = vrot.lane.b32.xlu0 %v535, 127
        %v584 = vpop.permute.xlu0 %583
        %585 = vrot.lane.b32.xlu0 %v536, 127
        %v586 = vpop.permute.xlu0 %585
        %v589 = vadd.f32 %v559, %v584
        %v590 = vadd.f32 %v560, %v586
        %591 = vrot.lane.b32.xlu0 %v537, 126
        %v592 = vpop.permute.xlu0 %591
        %593 = vrot.lane.b32.xlu0 %v538, 126
        %v594 = vpop.permute.xlu0 %593
        %v597 = vadd.f32 %v589, %v592
        %v598 = vadd.f32 %v590, %v594
        %599 = vrot.lane.b32.xlu0 %v535, 125
        %v600 = vpop.permute.xlu0 %599
        %601 = vrot.lane.b32.xlu0 %v536, 125
        %v602 = vpop.permute.xlu0 %601
        %v605 = vadd.f32 %v597, %v600
        %v606 = vadd.f32 %v598, %v602
        %608 = vset.pattern.permute.xlu0 124
        %609 = vperm.xlu0 %608, %v605
        %v610 = vpop.permute.xlu0 %609
        %613 = vset.pattern.permute.xlu0 124
        %614 = vperm.xlu0 %613, %v606
        %v615 = vpop.permute.xlu0 %614
        %v617 = vsel %vm288, %v610, %v581
        %v618 = vsel %vm288, %v615, %v582
        %v619 = vadd.f32 %v511, %v504
        %v620 = vadd.f32 %v512, %v506
        %623 = vrot.lane.b32.xlu0 %v495, 126
        %v624 = vpop.permute.xlu0 %623
        %625 = vrot.lane.b32.xlu0 %v496, 126
        %v626 = vpop.permute.xlu0 %625
        %v629 = vadd.f32 %v619, %v624
        %v630 = vadd.f32 %v620, %v626
        %632 = vset.pattern.permute.xlu0 125
        %633 = vperm.xlu0 %632, %v629
        %v634 = vpop.permute.xlu0 %633
        %637 = vset.pattern.permute.xlu0 125
        %638 = vperm.xlu0 %637, %v630
        %v639 = vpop.permute.xlu0 %638
        %v641 = vsel %vm315, %v634, %v617
        %v642 = vsel %vm315, %v639, %v618
        %v643 = vrot.slane %v641, 6
        %v644 = vrot.slane %v642, 6
        %v645 = vsel %vm332, %v643, %v644
        %v646 = vsel %vm332, %v644, %v643
        %v647 = vrot.slane %v641, 2
        %v648 = vrot.slane %v642, 2
        %v649 = vsel %vm337, %v647, %v648
        %v650 = vsel %vm337, %v648, %v647
        %v651 = vadd.f32 %v646, %v649
        %v652 = vadd.f32 %v645, %v650
        %v653 = vmul.f32 %v651, 0.054488685
        %v654 = vmul.f32 %v652, 0.054488685
        %v655 = vrot.slane %v641, 7
        %v656 = vrot.slane %v642, 7
        %v657 = vsel %vm346, %v655, %v656
        %v658 = vsel %vm346, %v656, %v655
        %v659 = vrot.slane %v641, 1
        %v660 = vrot.slane %v642, 1
        %v661 = vsel %vm351, %v659, %v660
        %v662 = vsel %vm351, %v660, %v659
        %v663 = vadd.f32 %v658, %v661
        %v664 = vadd.f32 %v657, %v662
        %v665 = vmul.f32 %v663, 0.24420135
        %v666 = vmul.f32 %v664, 0.24420135
        %v667 = vadd.f32 %v653, %v665
        %v668 = vadd.f32 %v654, %v666
        %v669 = vmul.f32 %v641, 0.40261996
        %v670 = vmul.f32 %v642, 0.40261996
        %v671 = vadd.f32 %v667, %v669
        %v672 = vadd.f32 %v668, %v670
        %v673 = vmul.f32 %v641, 0.4884027
        %v675 = vrot.slane %v673, 1
        %v677 = vadd.f32 %v669, %v675
        %v678 = vmul.f32 %v641, 0.10897737
        %v680 = vrot.slane %v678, 2
        %v682 = vadd.f32 %v677, %v680
        %v683 = vlaneseq
        %v684 = vshrl.u32 %v683, 7
        %v685 = vsub.s32 0, %v684
        %v686 = vrot.slane %v682, %v685
        %v687 = vsel %vm379, %v686, %v671
        %v688 = vsel %vm380, %v686, %v672
        %v689 = vmul.f32 %v641, 0.24420135
        %v690 = vmul.f32 %v641, 0.45710862
        %v692 = vrot.slane %v690, 1
        %v694 = vadd.f32 %v689, %v692
        %v696 = vrot.slane %v689, 2
        %v698 = vadd.f32 %v694, %v696
        %v699 = vmul.f32 %v641, 0.054488685
        %v701 = vrot.slane %v699, 3
        %v703 = vadd.f32 %v698, %v701
        %v704 = vlaneseq
        %v705 = vshrl.u32 %v704, 7
        %v706 = vsub.s32 0, %v705
        %v707 = vrot.slane %v703, %v706
        %v708 = vsel %vm406, %v707, %v687
        %v709 = vsel %vm407, %v707, %v688
        %v710 = vmul.f32 %v642, 0.054488685
        %v711 = vmul.f32 %v642, 0.24420135
        %v713 = vrot.slane %v711, 1
        %v715 = vadd.f32 %v710, %v713
        %v716 = vmul.f32 %v642, 0.45710862
        %v718 = vrot.slane %v716, 2
        %v720 = vadd.f32 %v715, %v718
        %v721 = vrot.slane %v711, 3
        %v723 = vadd.f32 %v720, %v721
        %v724 = vlaneseq
        %v725 = vshrl.u32 %v724, 7
        %v726 = vsub.s32 4, %v725
        %v727 = vrot.slane %v723, %v726
        %v728 = vsel %vm432, %v727, %v708
        %v729 = vsel %vm433, %v727, %v709
        %v730 = vmul.f32 %v642, 0.10897737
        %v731 = vmul.f32 %v642, 0.4884027
        %v733 = vrot.slane %v731, 1
        %v735 = vadd.f32 %v730, %v733
        %v737 = vrot.slane %v670, 2
        %v739 = vadd.f32 %v735, %v737
        %v740 = vlaneseq
        %v741 = vshrl.u32 %v740, 7
        %v742 = vsub.s32 5, %v741
        %v743 = vrot.slane %v739, %v742
        %v744 = vsel %vm454, %v743, %v728
        %v745 = vsel %vm455, %v743, %v729
        %v746 = vsub.f32 %v467, %v744
        %v747 = vsub.f32 %v468, %v745
        %s748 = scalar_lea.vmem %s135, 16 [#allocation5]
        %749 = vst [vmem:[%s748] sm:$0xff] %v746
        %750 = vst [vmem:[%s748 + $0x8] sm:$0xff] %v747
        %s751 = scalar_lea.vmem %s117, 32 [#allocation2]
        %v752 = vld [vmem:[%s751] sm:$0xff]
        %v753 = vld [vmem:[%s751 + $0x8] sm:$0xff]
        %754 = vrot.lane.b32.xlu0 %v752, 2
        %v755 = vpop.permute.xlu0 %754
        %756 = vrot.lane.b32.xlu0 %v753, 2
        %v757 = vpop.permute.xlu0 %756
        %758 = vrot.lane.b32.xlu0 %v752, 126
        %v759 = vpop.permute.xlu0 %758
        %760 = vrot.lane.b32.xlu0 %v753, 126
        %v761 = vpop.permute.xlu0 %760
        %v762 = vadd.f32 %v755, %v759
        %v763 = vadd.f32 %v757, %v761
        %v764 = vmul.f32 %v762, 0.054488685
        %v765 = vmul.f32 %v763, 0.054488685
        %766 = vrot.lane.b32.xlu0 %v752, 1
        %v767 = vpop.permute.xlu0 %766
        %768 = vrot.lane.b32.xlu0 %v753, 1
        %v769 = vpop.permute.xlu0 %768
        %770 = vrot.lane.b32.xlu0 %v752, 127
        %v771 = vpop.permute.xlu0 %770
        %772 = vrot.lane.b32.xlu0 %v753, 127
        %v773 = vpop.permute.xlu0 %772
        %v774 = vadd.f32 %v767, %v771
        %v775 = vadd.f32 %v769, %v773
        %v776 = vmul.f32 %v774, 0.24420135
        %v777 = vmul.f32 %v775, 0.24420135
        %v778 = vadd.f32 %v764, %v776
        %v779 = vadd.f32 %v765, %v777
        %v780 = vmul.f32 %v752, 0.40261996
        %v781 = vmul.f32 %v753, 0.40261996
        %v782 = vadd.f32 %v778, %v780
        %v783 = vadd.f32 %v779, %v781
        %v784 = vmul.f32 %v752, 0.4884027
        %v785 = vmul.f32 %v753, 0.4884027
        %788 = vrot.lane.b32.xlu0 %v784, 127
        %v789 = vpop.permute.xlu0 %788
        %790 = vrot.lane.b32.xlu0 %v785, 127
        %v791 = vpop.permute.xlu0 %790
        %v794 = vadd.f32 %v780, %v789
        %v795 = vadd.f32 %v781, %v791
        %v796 = vmul.f32 %v752, 0.10897737
        %v797 = vmul.f32 %v753, 0.10897737
        %800 = vrot.lane.b32.xlu0 %v796, 126
        %v801 = vpop.permute.xlu0 %800
        %802 = vrot.lane.b32.xlu0 %v797, 126
        %v803 = vpop.permute.xlu0 %802
        %v806 = vadd.f32 %v794, %v801
        %v807 = vadd.f32 %v795, %v803
        %809 = vset.pattern.permute.xlu0 0
        %810 = vperm.xlu0 %809, %v806
        %v811 = vpop.permute.xlu0 %810
        %814 = vset.pattern.permute.xlu0 0
        %815 = vperm.xlu0 %814, %v807
        %v816 = vpop.permute.xlu0 %815
        %v818 = vsel %vm198, %v811, %v782
        %v819 = vsel %vm198, %v816, %v783
        %v820 = vmul.f32 %v752, 0.24420135
        %v821 = vmul.f32 %v753, 0.24420135
        %v822 = vmul.f32 %v752, 0.45710862
        %v823 = vmul.f32 %v753, 0.45710862
        %826 = vrot.lane.b32.xlu0 %v822, 127
        %v827 = vpop.permute.xlu0 %826
        %828 = vrot.lane.b32.xlu0 %v823, 127
        %v829 = vpop.permute.xlu0 %828
        %v832 = vadd.f32 %v820, %v827
        %v833 = vadd.f32 %v821, %v829
        %836 = vrot.lane.b32.xlu0 %v820, 126
        %v837 = vpop.permute.xlu0 %836
        %838 = vrot.lane.b32.xlu0 %v821, 126
        %v839 = vpop.permute.xlu0 %838
        %v842 = vadd.f32 %v832, %v837
        %v843 = vadd.f32 %v833, %v839
        %v844 = vmul.f32 %v752, 0.054488685
        %v845 = vmul.f32 %v753, 0.054488685
        %848 = vrot.lane.b32.xlu0 %v844, 125
        %v849 = vpop.permute.xlu0 %848
        %850 = vrot.lane.b32.xlu0 %v845, 125
        %v851 = vpop.permute.xlu0 %850
        %v854 = vadd.f32 %v842, %v849
        %v855 = vadd.f32 %v843, %v851
        %857 = vset.pattern.permute.xlu0 0
        %858 = vperm.xlu0 %857, %v854
        %v859 = vpop.permute.xlu0 %858
        %862 = vset.pattern.permute.xlu0 0
        %863 = vperm.xlu0 %862, %v855
        %v864 = vpop.permute.xlu0 %863
        %v866 = vsel %vm249, %v859, %v818
        %v867 = vsel %vm249, %v864, %v819
        %868 = vrot.lane.b32.xlu0 %v820, 127
        %v869 = vpop.permute.xlu0 %868
        %870 = vrot.lane.b32.xlu0 %v821, 127
        %v871 = vpop.permute.xlu0 %870
        %v874 = vadd.f32 %v844, %v869
        %v875 = vadd.f32 %v845, %v871
        %876 = vrot.lane.b32.xlu0 %v822, 126
        %v877 = vpop.permute.xlu0 %876
        %878 = vrot.lane.b32.xlu0 %v823, 126
        %v879 = vpop.permute.xlu0 %878
        %v882 = vadd.f32 %v874, %v877
        %v883 = vadd.f32 %v875, %v879
        %884 = vrot.lane.b32.xlu0 %v820, 125
        %v885 = vpop.permute.xlu0 %884
        %886 = vrot.lane.b32.xlu0 %v821, 125
        %v887 = vpop.permute.xlu0 %886
        %v890 = vadd.f32 %v882, %v885
        %v891 = vadd.f32 %v883, %v887
        %893 = vset.pattern.permute.xlu0 124
        %894 = vperm.xlu0 %893, %v890
        %v895 = vpop.permute.xlu0 %894
        %898 = vset.pattern.permute.xlu0 124
        %899 = vperm.xlu0 %898, %v891
        %v900 = vpop.permute.xlu0 %899
        %v902 = vsel %vm288, %v895, %v866
        %v903 = vsel %vm288, %v900, %v867
        %v904 = vadd.f32 %v796, %v789
        %v905 = vadd.f32 %v797, %v791
        %908 = vrot.lane.b32.xlu0 %v780, 126
        %v909 = vpop.permute.xlu0 %908
        %910 = vrot.lane.b32.xlu0 %v781, 126
        %v911 = vpop.permute.xlu0 %910
        %v914 = vadd.f32 %v904, %v909
        %v915 = vadd.f32 %v905, %v911
        %917 = vset.pattern.permute.xlu0 125
        %918 = vperm.xlu0 %917, %v914
        %v919 = vpop.permute.xlu0 %918
        %922 = vset.pattern.permute.xlu0 125
        %923 = vperm.xlu0 %922, %v915
        %v924 = vpop.permute.xlu0 %923
        %v926 = vsel %vm315, %v919, %v902
        %v927 = vsel %vm315, %v924, %v903
        %v928 = vrot.slane %v926, 6
        %v929 = vrot.slane %v927, 6
        %v930 = vsel %vm332, %v928, %v929
        %v931 = vsel %vm332, %v929, %v928
        %v932 = vrot.slane %v926, 2
        %v933 = vrot.slane %v927, 2
        %v934 = vsel %vm337, %v932, %v933
        %v935 = vsel %vm337, %v933, %v932
        %v936 = vadd.f32 %v931, %v934
        %v937 = vadd.f32 %v930, %v935
        %v938 = vmul.f32 %v936, 0.054488685
        %v939 = vmul.f32 %v937, 0.054488685
        %v940 = vrot.slane %v926, 7
        %v941 = vrot.slane %v927, 7
        %v942 = vsel %vm346, %v940, %v941
        %v943 = vsel %vm346, %v941, %v940
        %v944 = vrot.slane %v926, 1
        %v945 = vrot.slane %v927, 1
        %v946 = vsel %vm351, %v944, %v945
        %v947 = vsel %vm351, %v945, %v944
        %v948 = vadd.f32 %v943, %v946
        %v949 = vadd.f32 %v942, %v947
        %v950 = vmul.f32 %v948, 0.24420135
        %v951 = vmul.f32 %v949, 0.24420135
        %v952 = vadd.f32 %v938, %v950
        %v953 = vadd.f32 %v939, %v951
        %v954 = vmul.f32 %v926, 0.40261996
        %v955 = vmul.f32 %v927, 0.40261996
        %v956 = vadd.f32 %v952, %v954
        %v957 = vadd.f32 %v953, %v955
        %v958 = vmul.f32 %v926, 0.4884027
        %v960 = vrot.slane %v958, 1
        %v962 = vadd.f32 %v954, %v960
        %v963 = vmul.f32 %v926, 0.10897737
        %v965 = vrot.slane %v963, 2
        %v967 = vadd.f32 %v962, %v965
        %v968 = vlaneseq
        %v969 = vshrl.u32 %v968, 7
        %v970 = vsub.s32 0, %v969
        %v971 = vrot.slane %v967, %v970
        %v972 = vsel %vm379, %v971, %v956
        %v973 = vsel %vm380, %v971, %v957
        %v974 = vmul.f32 %v926, 0.24420135
        %v975 = vmul.f32 %v926, 0.45710862
        %v977 = vrot.slane %v975, 1
        %v979 = vadd.f32 %v974, %v977
        %v981 = vrot.slane %v974, 2
        %v983 = vadd.f32 %v979, %v981
        %v984 = vmul.f32 %v926, 0.054488685
        %v986 = vrot.slane %v984, 3
        %v988 = vadd.f32 %v983, %v986
        %v989 = vlaneseq
        %v990 = vshrl.u32 %v989, 7
        %v991 = vsub.s32 0, %v990
        %v992 = vrot.slane %v988, %v991
        %v993 = vsel %vm406, %v992, %v972
        %v994 = vsel %vm407, %v992, %v973
        %v995 = vmul.f32 %v927, 0.054488685
        %v996 = vmul.f32 %v927, 0.24420135
        %v998 = vrot.slane %v996, 1
        %v1000 = vadd.f32 %v995, %v998
        %v1001 = vmul.f32 %v927, 0.45710862
        %v1003 = vrot.slane %v1001, 2
        %v1005 = vadd.f32 %v1000, %v1003
        %v1006 = vrot.slane %v996, 3
        %v1008 = vadd.f32 %v1005, %v1006
        %v1009 = vlaneseq
        %v1010 = vshrl.u32 %v1009, 7
        %v1011 = vsub.s32 4, %v1010
        %v1012 = vrot.slane %v1008, %v1011
        %v1013 = vsel %vm432, %v1012, %v993
        %v1014 = vsel %vm433, %v1012, %v994
        %v1015 = vmul.f32 %v927, 0.10897737
        %v1016 = vmul.f32 %v927, 0.4884027
        %v1018 = vrot.slane %v1016, 1
        %v1020 = vadd.f32 %v1015, %v1018
        %v1022 = vrot.slane %v955, 2
        %v1024 = vadd.f32 %v1020, %v1022
        %v1025 = vlaneseq
        %v1026 = vshrl.u32 %v1025, 7
        %v1027 = vsub.s32 5, %v1026
        %v1028 = vrot.slane %v1024, %v1027
        %v1029 = vsel %vm454, %v1028, %v1013
        %v1030 = vsel %vm455, %v1028, %v1014
        %v1031 = vsub.f32 %v752, %v1029
        %v1032 = vsub.f32 %v753, %v1030
        %s1033 = scalar_lea.vmem %s135, 32 [#allocation5]
        %1034 = vst [vmem:[%s1033] sm:$0xff] %v1031
        %1035 = vst [vmem:[%s1033 + $0x8] sm:$0xff] %v1032
        %s1036 = scalar_lea.vmem %s117, 48 [#allocation2]
        %v1037 = vld [vmem:[%s1036] sm:$0xff]
        %v1038 = vld [vmem:[%s1036 + $0x8] sm:$0xff]
        %1039 = vrot.lane.b32.xlu0 %v1037, 2
        %v1040 = vpop.permute.xlu0 %1039
        %1041 = vrot.lane.b32.xlu0 %v1038, 2
        %v1042 = vpop.permute.xlu0 %1041
        %1043 = vrot.lane.b32.xlu0 %v1037, 126
        %v1044 = vpop.permute.xlu0 %1043
        %1045 = vrot.lane.b32.xlu0 %v1038, 126
        %v1046 = vpop.permute.xlu0 %1045
        %v1047 = vadd.f32 %v1040, %v1044
        %v1048 = vadd.f32 %v1042, %v1046
        %v1049 = vmul.f32 %v1047, 0.054488685
        %v1050 = vmul.f32 %v1048, 0.054488685
        %1051 = vrot.lane.b32.xlu0 %v1037, 1
        %v1052 = vpop.permute.xlu0 %1051
        %1053 = vrot.lane.b32.xlu0 %v1038, 1
        %v1054 = vpop.permute.xlu0 %1053
        %1055 = vrot.lane.b32.xlu0 %v1037, 127
        %v1056 = vpop.permute.xlu0 %1055
        %1057 = vrot.lane.b32.xlu0 %v1038, 127
        %v1058 = vpop.permute.xlu0 %1057
        %v1059 = vadd.f32 %v1052, %v1056
        %v1060 = vadd.f32 %v1054, %v1058
        %v1061 = vmul.f32 %v1059, 0.24420135
        %v1062 = vmul.f32 %v1060, 0.24420135
        %v1063 = vadd.f32 %v1049, %v1061
        %v1064 = vadd.f32 %v1050, %v1062
        %v1065 = vmul.f32 %v1037, 0.40261996
        %v1066 = vmul.f32 %v1038, 0.40261996
        %v1067 = vadd.f32 %v1063, %v1065
        %v1068 = vadd.f32 %v1064, %v1066
        %v1069 = vmul.f32 %v1037, 0.4884027
        %v1070 = vmul.f32 %v1038, 0.4884027
        %1073 = vrot.lane.b32.xlu0 %v1069, 127
        %v1074 = vpop.permute.xlu0 %1073
        %1075 = vrot.lane.b32.xlu0 %v1070, 127
        %v1076 = vpop.permute.xlu0 %1075
        %v1079 = vadd.f32 %v1065, %v1074
        %v1080 = vadd.f32 %v1066, %v1076
        %v1081 = vmul.f32 %v1037, 0.10897737
        %v1082 = vmul.f32 %v1038, 0.10897737
        %1085 = vrot.lane.b32.xlu0 %v1081, 126
        %v1086 = vpop.permute.xlu0 %1085
        %1087 = vrot.lane.b32.xlu0 %v1082, 126
        %v1088 = vpop.permute.xlu0 %1087
        %v1091 = vadd.f32 %v1079, %v1086
        %v1092 = vadd.f32 %v1080, %v1088
        %1094 = vset.pattern.permute.xlu0 0
        %1095 = vperm.xlu0 %1094, %v1091
        %v1096 = vpop.permute.xlu0 %1095
        %1099 = vset.pattern.permute.xlu0 0
        %1100 = vperm.xlu0 %1099, %v1092
        %v1101 = vpop.permute.xlu0 %1100
        %v1103 = vsel %vm198, %v1096, %v1067
        %v1104 = vsel %vm198, %v1101, %v1068
        %v1105 = vmul.f32 %v1037, 0.24420135
        %v1106 = vmul.f32 %v1038, 0.24420135
        %v1107 = vmul.f32 %v1037, 0.45710862
        %v1108 = vmul.f32 %v1038, 0.45710862
        %1111 = vrot.lane.b32.xlu0 %v1107, 127
        %v1112 = vpop.permute.xlu0 %1111
        %1113 = vrot.lane.b32.xlu0 %v1108, 127
        %v1114 = vpop.permute.xlu0 %1113
        %v1117 = vadd.f32 %v1105, %v1112
        %v1118 = vadd.f32 %v1106, %v1114
        %1121 = vrot.lane.b32.xlu0 %v1105, 126
        %v1122 = vpop.permute.xlu0 %1121
        %1123 = vrot.lane.b32.xlu0 %v1106, 126
        %v1124 = vpop.permute.xlu0 %1123
        %v1127 = vadd.f32 %v1117, %v1122
        %v1128 = vadd.f32 %v1118, %v1124
        %v1129 = vmul.f32 %v1037, 0.054488685
        %v1130 = vmul.f32 %v1038, 0.054488685
        %1133 = vrot.lane.b32.xlu0 %v1129, 125
        %v1134 = vpop.permute.xlu0 %1133
        %1135 = vrot.lane.b32.xlu0 %v1130, 125
        %v1136 = vpop.permute.xlu0 %1135
        %v1139 = vadd.f32 %v1127, %v1134
        %v1140 = vadd.f32 %v1128, %v1136
        %1142 = vset.pattern.permute.xlu0 0
        %1143 = vperm.xlu0 %1142, %v1139
        %v1144 = vpop.permute.xlu0 %1143
        %1147 = vset.pattern.permute.xlu0 0
        %1148 = vperm.xlu0 %1147, %v1140
        %v1149 = vpop.permute.xlu0 %1148
        %v1151 = vsel %vm249, %v1144, %v1103
        %v1152 = vsel %vm249, %v1149, %v1104
        %1153 = vrot.lane.b32.xlu0 %v1105, 127
        %v1154 = vpop.permute.xlu0 %1153
        %1155 = vrot.lane.b32.xlu0 %v1106, 127
        %v1156 = vpop.permute.xlu0 %1155
        %v1159 = vadd.f32 %v1129, %v1154
        %v1160 = vadd.f32 %v1130, %v1156
        %1161 = vrot.lane.b32.xlu0 %v1107, 126
        %v1162 = vpop.permute.xlu0 %1161
        %1163 = vrot.lane.b32.xlu0 %v1108, 126
        %v1164 = vpop.permute.xlu0 %1163
        %v1167 = vadd.f32 %v1159, %v1162
        %v1168 = vadd.f32 %v1160, %v1164
        %1169 = vrot.lane.b32.xlu0 %v1105, 125
        %v1170 = vpop.permute.xlu0 %1169
        %1171 = vrot.lane.b32.xlu0 %v1106, 125
        %v1172 = vpop.permute.xlu0 %1171
        %v1175 = vadd.f32 %v1167, %v1170
        %v1176 = vadd.f32 %v1168, %v1172
        %1178 = vset.pattern.permute.xlu0 124
        %1179 = vperm.xlu0 %1178, %v1175
        %v1180 = vpop.permute.xlu0 %1179
        %1183 = vset.pattern.permute.xlu0 124
        %1184 = vperm.xlu0 %1183, %v1176
        %v1185 = vpop.permute.xlu0 %1184
        %v1187 = vsel %vm288, %v1180, %v1151
        %v1188 = vsel %vm288, %v1185, %v1152
        %v1189 = vadd.f32 %v1081, %v1074
        %v1190 = vadd.f32 %v1082, %v1076
        %1193 = vrot.lane.b32.xlu0 %v1065, 126
        %v1194 = vpop.permute.xlu0 %1193
        %1195 = vrot.lane.b32.xlu0 %v1066, 126
        %v1196 = vpop.permute.xlu0 %1195
        %v1199 = vadd.f32 %v1189, %v1194
        %v1200 = vadd.f32 %v1190, %v1196
        %1202 = vset.pattern.permute.xlu0 125
        %1203 = vperm.xlu0 %1202, %v1199
        %v1204 = vpop.permute.xlu0 %1203
        %1207 = vset.pattern.permute.xlu0 125
        %1208 = vperm.xlu0 %1207, %v1200
        %v1209 = vpop.permute.xlu0 %1208
        %v1211 = vsel %vm315, %v1204, %v1187
        %v1212 = vsel %vm315, %v1209, %v1188
        %v1213 = vrot.slane %v1211, 6
        %v1214 = vrot.slane %v1212, 6
        %v1215 = vsel %vm332, %v1213, %v1214
        %v1216 = vsel %vm332, %v1214, %v1213
        %v1217 = vrot.slane %v1211, 2
        %v1218 = vrot.slane %v1212, 2
        %v1219 = vsel %vm337, %v1217, %v1218
        %v1220 = vsel %vm337, %v1218, %v1217
        %v1221 = vadd.f32 %v1216, %v1219
        %v1222 = vadd.f32 %v1215, %v1220
        %v1223 = vmul.f32 %v1221, 0.054488685
        %v1224 = vmul.f32 %v1222, 0.054488685
        %v1225 = vrot.slane %v1211, 7
        %v1226 = vrot.slane %v1212, 7
        %v1227 = vsel %vm346, %v1225, %v1226
        %v1228 = vsel %vm346, %v1226, %v1225
        %v1229 = vrot.slane %v1211, 1
        %v1230 = vrot.slane %v1212, 1
        %v1231 = vsel %vm351, %v1229, %v1230
        %v1232 = vsel %vm351, %v1230, %v1229
        %v1233 = vadd.f32 %v1228, %v1231
        %v1234 = vadd.f32 %v1227, %v1232
        %v1235 = vmul.f32 %v1233, 0.24420135
        %v1236 = vmul.f32 %v1234, 0.24420135
        %v1237 = vadd.f32 %v1223, %v1235
        %v1238 = vadd.f32 %v1224, %v1236
        %v1239 = vmul.f32 %v1211, 0.40261996
        %v1240 = vmul.f32 %v1212, 0.40261996
        %v1241 = vadd.f32 %v1237, %v1239
        %v1242 = vadd.f32 %v1238, %v1240
        %v1243 = vmul.f32 %v1211, 0.4884027
        %v1245 = vrot.slane %v1243, 1
        %v1247 = vadd.f32 %v1239, %v1245
        %v1248 = vmul.f32 %v1211, 0.10897737
        %v1250 = vrot.slane %v1248, 2
        %v1252 = vadd.f32 %v1247, %v1250
        %v1253 = vlaneseq
        %v1254 = vshrl.u32 %v1253, 7
        %v1255 = vsub.s32 0, %v1254
        %v1256 = vrot.slane %v1252, %v1255
        %v1257 = vsel %vm379, %v1256, %v1241
        %v1258 = vsel %vm380, %v1256, %v1242
        %v1259 = vmul.f32 %v1211, 0.24420135
        %v1260 = vmul.f32 %v1211, 0.45710862
        %v1262 = vrot.slane %v1260, 1
        %v1264 = vadd.f32 %v1259, %v1262
        %v1266 = vrot.slane %v1259, 2
        %v1268 = vadd.f32 %v1264, %v1266
        %v1269 = vmul.f32 %v1211, 0.054488685
        %v1271 = vrot.slane %v1269, 3
        %v1273 = vadd.f32 %v1268, %v1271
        %v1274 = vlaneseq
        %v1275 = vshrl.u32 %v1274, 7
        %v1276 = vsub.s32 0, %v1275
        %v1277 = vrot.slane %v1273, %v1276
        %v1278 = vsel %vm406, %v1277, %v1257
        %v1279 = vsel %vm407, %v1277, %v1258
        %v1280 = vmul.f32 %v1212, 0.054488685
        %v1281 = vmul.f32 %v1212, 0.24420135
        %v1283 = vrot.slane %v1281, 1
        %v1285 = vadd.f32 %v1280, %v1283
        %v1286 = vmul.f32 %v1212, 0.45710862
        %v1288 = vrot.slane %v1286, 2
        %v1290 = vadd.f32 %v1285, %v1288
        %v1291 = vrot.slane %v1281, 3
        %v1293 = vadd.f32 %v1290, %v1291
        %v1294 = vlaneseq
        %v1295 = vshrl.u32 %v1294, 7
        %v1296 = vsub.s32 4, %v1295
        %v1297 = vrot.slane %v1293, %v1296
        %v1298 = vsel %vm432, %v1297, %v1278
        %v1299 = vsel %vm433, %v1297, %v1279
        %v1300 = vmul.f32 %v1212, 0.10897737
        %v1301 = vmul.f32 %v1212, 0.4884027
        %v1303 = vrot.slane %v1301, 1
        %v1305 = vadd.f32 %v1300, %v1303
        %v1307 = vrot.slane %v1240, 2
        %v1309 = vadd.f32 %v1305, %v1307
        %v1310 = vlaneseq
        %v1311 = vshrl.u32 %v1310, 7
        %v1312 = vsub.s32 5, %v1311
        %v1313 = vrot.slane %v1309, %v1312
        %v1314 = vsel %vm454, %v1313, %v1298
        %v1315 = vsel %vm455, %v1313, %v1299
        %v1316 = vsub.f32 %v1037, %v1314
        %v1317 = vsub.f32 %v1038, %v1315
        %s1318 = scalar_lea.vmem %s135, 48 [#allocation5]
        %1319 = vst [vmem:[%s1318] sm:$0xff] %v1316
        %1320 = vst [vmem:[%s1318 + $0x8] sm:$0xff] %v1317
        %s1321 = sand.u32 %s52, 1
        %s1322 = scalar_lea.sflag [#allocation4], %s1321
        %s1323 = sand.u32 %s52, 1
        %s1324 = smul.addr %s1323, 64
        %s1325 = scalar_lea.vmem [#allocation5], %s1324
        // Predicated region
        $region29: #{tpu_custom_call.1} parent=23 // pred_check
          %p1326 = pneg %p62
        $region30: #{tpu_custom_call.1} parent=23 // pred_check_branch
          %1328 = sbr.rel (%p1326) target = $region32
        $region31: #{tpu_custom_call.1} parent=23 // pred_region
          %s1329 = smul.u32 4, %s18
          %s1331 = ssub.s32 1024, 1024
          %1332 = vsyncadd %s1322, %s1331
          %s1333 = smul.addr %s1329, 2
          %s1334 = smul.addr %s1333, 128
          %s1335 = scalar_lea.hbm %s1, %s1334
          %s1336 = sshll.u32 %s1325, 4
          %s1337 = int_to_ptr.vmem [resolvable:$true] %s1336
          %1342 = dma.vmem_to_hbm [thread:$0]  %s1337, 1024, %s1335, %s1322, 128, 128, 8
        $region32: #{tpu_custom_call.1} parent=23 // pred_fallthru
          _
      $region24: #{tpu_custom_call.1} parent=5 // pred_fallthru
        _
      %p1343 = scmp.le.s32.totalorder 2, %s13
      // Predicated region
      $region33: #{tpu_custom_call.1} parent=5 // pred_check
        %p1344 = pneg %p1343
      $region34: #{tpu_custom_call.1} parent=5 // pred_check_branch
        %1346 = sbr.rel (%p1344) target = $region36
      $region35: #{tpu_custom_call.1} parent=5 // pred_region
        %s1347 = ssub.s32 %s13, 2
        // Predicated region
        $region37: #{tpu_custom_call.1} parent=35 // pred_check
          %p1348 = pneg %p68
        $region38: #{tpu_custom_call.1} parent=35 // pred_check_branch
          %1350 = sbr.rel (%p1348) target = $region40
        $region39: #{tpu_custom_call.1} parent=35 // pred_region
          %s1351 = sand.u32 %s53, 1
          %s1352 = scalar_lea.sflag [#allocation4], %s1351
          %s1353 = sand.u32 %s53, 1
          %s1354 = smul.addr %s1353, 64
          %s1355 = scalar_lea.vmem [#allocation5], %s1354
          %1356 = dma.done %s1352, 1024
        $region40: #{tpu_custom_call.1} parent=35 // pred_fallthru
          _
      $region36: #{tpu_custom_call.1} parent=5 // pred_fallthru
        _
    $region6: #{tpu_custom_call.1} parent=1 // loop_footer
      %s17 = sadd.s32 1, %s13
    $region7: #{tpu_custom_call.1} parent=1 // loop_footer_branch
      %12 = sbr.rel target = $region3
    $region8: #{tpu_custom_call.1} parent=1 // loop_exit
      _
    %1357 = vsyncpa [#allocation3], 1
    %s1358 = scalar_lea.sflag [#allocation3], 1
    %1359 = vsyncpa %s1358, 1
    %1360 = vsyncpa [#allocation4], 1
    %s1361 = scalar_lea.sflag [#allocation4], 1
    %1362 = vsyncpa %s1361, 1

</llo_original>
